<compile_context>
chip_gen: v6e
topology: v6e:2x2x1
jax: 0.10.0
libtpu: 0.0.40
codegen_flags: <defaults>
</compile_context>

<pallas_src>
import jax
import jax.numpy as jnp
from jax.experimental import pallas as pl
from jax.experimental.pallas import tpu as pltpu


# ----------------------------------------------------------------------------
# Fused Pallas kernel: whole GVAE forward for ONE graph per grid step
# ----------------------------------------------------------------------------
def _gvae_fused_kernel(a_ref, x_ref, eps_ref,
                       w1_ref, b1_ref,
                       wmu_ref, bmu_ref,
                       wlv_ref, blv_ref,
                       wd1_ref, bd1_ref,
                       wd2_ref, bd2_ref,
                       recon_ref, mu_ref, lv_ref):
    f32 = jnp.float32
    bf16 = jnp.bfloat16

    a = a_ref[0]      # (N, N)  bf16 normalized adjacency for this graph
    x = x_ref[0]      # (N, Fin) bf16
    eps = eps_ref[0]  # (N, L)  f32

    # --- Encoder layer 1 (widening: Fin < hidden): (A @ X) @ W1 + b1 --------
    ax = jnp.dot(a, x, preferred_element_type=f32)
    h = jnp.dot(ax.astype(bf16), w1_ref[...], preferred_element_type=f32) + b1_ref[...]
    h = jnp.maximum(h, 0.0)                      # f32 elementwise
    h_b = h.astype(bf16)

    # --- mu / logvar heads (narrowing): A @ (H @ W) + b ----------------------
    hw_mu = jnp.dot(h_b, wmu_ref[...], preferred_element_type=f32)
    mu = jnp.dot(a, hw_mu.astype(bf16), preferred_element_type=f32) + bmu_ref[...]
    hw_lv = jnp.dot(h_b, wlv_ref[...], preferred_element_type=f32)
    logvar = jnp.dot(a, hw_lv.astype(bf16), preferred_element_type=f32) + blv_ref[...]

    # --- Reparameterize (eps ~ N(0,1) supplied from outside), f32 -----------
    z = mu + eps * jnp.exp(0.5 * logvar)

    # --- Decoder layer 1 (widening: L < hidden): (A @ Z) @ Wd1 + bd1 --------
    az = jnp.dot(a, z.astype(bf16), preferred_element_type=f32)
    h2 = jnp.dot(az.astype(bf16), wd1_ref[...], preferred_element_type=f32) + bd1_ref[...]
    h2 = jnp.maximum(h2, 0.0)

    # --- Decoder layer 2 (narrowing): A @ (H2 @ Wd2) + bd2 -------------------
    h2w = jnp.dot(h2.astype(bf16), wd2_ref[...], preferred_element_type=f32)
    recon = jnp.dot(a, h2w.astype(bf16), preferred_element_type=f32) + bd2_ref[...]

    # Three separate outputs — no in-kernel concat / slab relayout.
    # TODO(synk): for larger feature dims, pad last dims to multiples of 128
    # lanes to turn these masked vst.msk stores into full-lane stores.
    recon_ref[0] = recon.astype(recon_ref.dtype)
    mu_ref[0] = mu.astype(mu_ref.dtype)
    lv_ref[0] = logvar.astype(lv_ref.dtype)


def gvae_fused_call(a_hat, x, eps, params):
    """Single pallas_call over a batch of B graphs. Returns (recon, mu, logvar)."""
    b, n, input_dim = x.shape
    latent_dim = eps.shape[-1]
    hidden_dim = params["enc_w1"].shape[1]

    # Batched operands: one graph per grid step.
    batched = lambda shape: pl.BlockSpec((1,) + shape, lambda i: (i, 0, 0))
    # Weights/biases: full array, same block every step (only DMA'd once).
    full2d = lambda shape: pl.BlockSpec(shape, lambda i: (0, 0))

    in_specs = [
        batched((n, n)),                     # a_hat   (B, N, N)       bf16
        batched((n, input_dim)),             # x       (B, N, Fin)     bf16
        batched((n, latent_dim)),            # eps     (B, N, L)       f32
        full2d((input_dim, hidden_dim)),     # enc_w1                  bf16
        full2d((1, hidden_dim)),             # enc_b1                  f32
        full2d((hidden_dim, latent_dim)),    # enc_w_mu                bf16
        full2d((1, latent_dim)),             # enc_b_mu                f32
        full2d((hidden_dim, latent_dim)),    # enc_w_lv                bf16
        full2d((1, latent_dim)),             # enc_b_lv                f32
        full2d((latent_dim, hidden_dim)),    # dec_w1                  bf16
        full2d((1, hidden_dim)),             # dec_b1                  f32
        full2d((hidden_dim, input_dim)),     # dec_w2                  bf16
        full2d((1, input_dim)),              # dec_b2                  f32
    ]

    out_shape = (
        jax.ShapeDtypeStruct((b, n, input_dim), jnp.float32),   # recon
        jax.ShapeDtypeStruct((b, n, latent_dim), jnp.float32),  # mu
        jax.ShapeDtypeStruct((b, n, latent_dim), jnp.float32),  # logvar
    )
    out_specs = (
        batched((n, input_dim)),
        batched((n, latent_dim)),
        batched((n, latent_dim)),
    )

    recon, mu, logvar = pl.pallas_call(
        _gvae_fused_kernel,
        out_shape=out_shape,
        grid=(b,),
        in_specs=in_specs,
        out_specs=out_specs,
        compiler_params=pltpu.CompilerParams(
            dimension_semantics=("parallel",),      # shards batch across TCs on v7x
            vmem_limit_bytes=32 * 1024 * 1024,
        ),
    )(a_hat, x, eps,
      params["enc_w1"], params["enc_b1"],
      params["enc_w_mu"], params["enc_b_mu"],
      params["enc_w_lv"], params["enc_b_lv"],
      params["dec_w1"], params["dec_b1"],
      params["dec_w2"], params["dec_b2"])
    return recon, mu, logvar


# ----------------------------------------------------------------------------
# Glue: GCN normalization (dense normalized adjacency), parameter init
# ----------------------------------------------------------------------------
def build_norm_adj(edge_index, edge_attr, num_nodes):
    """Dense A_hat = D^{-1/2} (A + I) D^{-1/2} with edge_attr as edge weights.

    Duplicate edges accumulate (same as torch_geometric scatter-add semantics).
    """
    # TODO(synk): for large graphs keep the edge list sparse (scalar-prefetch
    # gather) instead of materializing a dense (N, N) A_hat.
    src, dst = edge_index[0], edge_index[1]
    loop = jnp.arange(num_nodes, dtype=edge_index.dtype)
    src = jnp.concatenate([src, loop])
    dst = jnp.concatenate([dst, loop])
    w = jnp.concatenate(
        [edge_attr.astype(jnp.float32), jnp.ones((num_nodes,), jnp.float32)]
    )
    deg = jnp.zeros((num_nodes,), jnp.float32).at[dst].add(w)
    dinv = jnp.where(deg > 0, jax.lax.rsqrt(jnp.where(deg > 0, deg, 1.0)), 0.0)
    norm = dinv[src] * w * dinv[dst]
    # message passing aggregates at the target node: A_hat[dst, src] += norm
    a_hat = jnp.zeros((num_nodes, num_nodes), jnp.float32).at[dst, src].add(norm)
    # bf16 storage: halves DMA bytes / VMEM for the only O(N^2) operand.
    return a_hat.astype(jnp.bfloat16)


def glorot(key, fin, fout):
    limit = (6.0 / (fin + fout)) ** 0.5
    return jax.random.uniform(key, (fin, fout), jnp.float32, -limit, limit)


def init_params(key, input_dim, hidden_dim, latent_dim):
    ks = jax.random.split(key, 5)
    bf16 = jnp.bfloat16
    # Weights stored bf16 (MXU-native, f32 accumulate); biases stay (1, F) f32.
    return {
        "enc_w1": glorot(ks[0], input_dim, hidden_dim).astype(bf16),
        "enc_b1": jnp.zeros((1, hidden_dim), jnp.float32),
        "enc_w_mu": glorot(ks[1], hidden_dim, latent_dim).astype(bf16),
        "enc_b_mu": jnp.zeros((1, latent_dim), jnp.float32),
        "enc_w_lv": glorot(ks[2], hidden_dim, latent_dim).astype(bf16),
        "enc_b_lv": jnp.zeros((1, latent_dim), jnp.float32),
        "dec_w1": glorot(ks[3], latent_dim, hidden_dim).astype(bf16),
        "dec_b1": jnp.zeros((1, hidden_dim), jnp.float32),
        "dec_w2": glorot(ks[4], hidden_dim, input_dim).astype(bf16),
        "dec_b2": jnp.zeros((1, input_dim), jnp.float32),
    }


@jax.jit
def gvae_forward(params, x, edge_index, edge_attr, eps):
    """x: (B, N, Fin), edge_index: (B, 2, E), edge_attr: (B, E), eps: (B, N, L)."""
    num_nodes = x.shape[1]
    a_hat = jax.vmap(lambda ei, ea: build_norm_adj(ei, ea, num_nodes))(
        edge_index, edge_attr
    )
    return gvae_fused_call(a_hat, x.astype(jnp.bfloat16), eps, params)


# ----------------------------------------------------------------------------
# Main
# ----------------------------------------------------------------------------
if __name__ == "__main__":
    B = 4           # graphs per batch
    N = 16          # nodes per graph
    E = 32          # edges per graph
    INPUT_DIM = 16
    HIDDEN_DIM = 32
    LATENT_DIM = 8

    key = jax.random.PRNGKey(0)
    k_x, k_ei, k_ea, k_eps, k_params = jax.random.split(key, 5)

    x = jax.random.normal(k_x, (B, N, INPUT_DIM), jnp.float32)
    edge_index = jax.random.randint(k_ei, (B, 2, E), 0, N, jnp.int32)
    edge_attr = jax.random.uniform(k_ea, (B, E), jnp.float32, 0.5, 1.5)  # edge weights
    eps = jax.random.normal(k_eps, (B, N, LATENT_DIM), jnp.float32)

    params = init_params(k_params, INPUT_DIM, HIDDEN_DIM, LATENT_DIM)

    recon, mu, logvar = gvae_forward(params, x, edge_index, edge_attr, eps)
    jax.block_until_ready((recon, mu, logvar))

    assert recon.shape == (B, N, INPUT_DIM)
    assert mu.shape == (B, N, LATENT_DIM)
    assert logvar.shape == (B, N, LATENT_DIM)
    assert bool(jnp.all(jnp.isfinite(recon)))
    assert bool(jnp.all(jnp.isfinite(mu)))
    assert bool(jnp.all(jnp.isfinite(logvar)))
    print("KERNEL_OK")
</pallas_src>

<mosaic_0001>
module attributes {stable_mosaic.version = 11 : i64} {
  func.func private @main(%arg0: i32) attributes {dimension_semantics = [#tpu.dimension_semantics<core_parallel>], iteration_bounds = array<i64: 2>, tpu.core_type = #tpu.core_type<sc_scalar_subcore>, window_params = []} {
    return
  }
}

module attributes {stable_mosaic.version = 11 : i64} {
  func.func private @main(%arg0: i32) attributes {dimension_semantics = [#tpu.dimension_semantics<core_parallel>], iteration_bounds = array<i64: 2>, tpu.core_type = #tpu.core_type<sc_scalar_subcore>, window_params = []} {
    return
  }
}

module attributes {stable_mosaic.version = 11 : i64} {
  func.func @_gvae_fused_kernel(%arg0: i32, %arg1: memref<1x16x16xbf16, #tpu.memory_space<vmem>>, %arg2: memref<1x16x16xbf16, #tpu.memory_space<vmem>>, %arg3: memref<1x16x8xf32, #tpu.memory_space<vmem>>, %arg4: memref<16x32xbf16, #tpu.memory_space<vmem>>, %arg5: memref<1x32xf32, #tpu.memory_space<vmem>>, %arg6: memref<32x8xbf16, #tpu.memory_space<vmem>>, %arg7: memref<1x8xf32, #tpu.memory_space<vmem>>, %arg8: memref<32x8xbf16, #tpu.memory_space<vmem>>, %arg9: memref<1x8xf32, #tpu.memory_space<vmem>>, %arg10: memref<8x32xbf16, #tpu.memory_space<vmem>>, %arg11: memref<1x32xf32, #tpu.memory_space<vmem>>, %arg12: memref<32x16xbf16, #tpu.memory_space<vmem>>, %arg13: memref<1x16xf32, #tpu.memory_space<vmem>>, %arg14: memref<1x16x16xf32, #tpu.memory_space<vmem>>, %arg15: memref<1x16x8xf32, #tpu.memory_space<vmem>>, %arg16: memref<1x16x8xf32, #tpu.memory_space<vmem>>) attributes {dimension_semantics = [#tpu.dimension_semantics<parallel>], iteration_bounds = array<i64: 4>, scalar_prefetch = 0 : i64, scratch_operands = 0 : i64, tpu.core_type = #tpu.core_type<tc>, window_params = [{transform_indices = @transform_0, window_bounds = array<i64: 1, 16, 16>}, {transform_indices = @transform_1, window_bounds = array<i64: 1, 16, 16>}, {transform_indices = @transform_2, window_bounds = array<i64: 1, 16, 8>}, {pipeline_mode = #tpu.pipeline_mode<synchronous>, transform_indices = @transform_3, window_bounds = array<i64: 16, 32>}, {pipeline_mode = #tpu.pipeline_mode<synchronous>, transform_indices = @transform_4, window_bounds = array<i64: 1, 32>}, {pipeline_mode = #tpu.pipeline_mode<synchronous>, transform_indices = @transform_5, window_bounds = array<i64: 32, 8>}, {pipeline_mode = #tpu.pipeline_mode<synchronous>, transform_indices = @transform_6, window_bounds = array<i64: 1, 8>}, {pipeline_mode = #tpu.pipeline_mode<synchronous>, transform_indices = @transform_7, window_bounds = array<i64: 32, 8>}, {pipeline_mode = #tpu.pipeline_mode<synchronous>, transform_indices = @transform_8, window_bounds = array<i64: 1, 8>}, {pipeline_mode = #tpu.pipeline_mode<synchronous>, transform_indices = @transform_9, window_bounds = array<i64: 8, 32>}, {pipeline_mode = #tpu.pipeline_mode<synchronous>, transform_indices = @transform_10, window_bounds = array<i64: 1, 32>}, {pipeline_mode = #tpu.pipeline_mode<synchronous>, transform_indices = @transform_11, window_bounds = array<i64: 32, 16>}, {pipeline_mode = #tpu.pipeline_mode<synchronous>, transform_indices = @transform_12, window_bounds = array<i64: 1, 16>}, {transform_indices = @transform_13, window_bounds = array<i64: 1, 16, 16>}, {transform_indices = @transform_14, window_bounds = array<i64: 1, 16, 8>}, {transform_indices = @transform_15, window_bounds = array<i64: 1, 16, 8>}]} {
    %c0 = arith.constant 0 : index
    %c0_0 = arith.constant 0 : index
    %c0_1 = arith.constant 0 : index
    %0 = vector.load %arg1[%c0, %c0_0, %c0_1] : memref<1x16x16xbf16, #tpu.memory_space<vmem>>, vector<1x16x16xbf16>
    %1 = vector.shape_cast %0 : vector<1x16x16xbf16> to vector<16x16xbf16>
    %c0_2 = arith.constant 0 : index
    %c0_3 = arith.constant 0 : index
    %c0_4 = arith.constant 0 : index
    %2 = vector.load %arg2[%c0_2, %c0_3, %c0_4] : memref<1x16x16xbf16, #tpu.memory_space<vmem>>, vector<1x16x16xbf16>
    %3 = vector.shape_cast %2 : vector<1x16x16xbf16> to vector<16x16xbf16>
    %c0_5 = arith.constant 0 : index
    %c0_6 = arith.constant 0 : index
    %c0_7 = arith.constant 0 : index
    %4 = vector.load %arg3[%c0_5, %c0_6, %c0_7] : memref<1x16x8xf32, #tpu.memory_space<vmem>>, vector<1x16x8xf32>
    %5 = vector.shape_cast %4 : vector<1x16x8xf32> to vector<16x8xf32>
    %cst = arith.constant dense<0.000000e+00> : vector<16x16xf32>
    %6 = tpu.matmul %1, %3, %cst {dimension_numbers = #tpu.dot_dimension_numbers<[1], [0], [0], [1], [0, 0, 1, 1], [], []>} : vector<16x16xbf16>, vector<16x16xbf16>, vector<16x16xf32> -> vector<16x16xf32>
    %7 = arith.truncf %6 : vector<16x16xf32> to vector<16x16xbf16>
    %c0_8 = arith.constant 0 : index
    %c0_9 = arith.constant 0 : index
    %8 = vector.load %arg4[%c0_8, %c0_9] : memref<16x32xbf16, #tpu.memory_space<vmem>>, vector<16x32xbf16>
    %cst_10 = arith.constant dense<0.000000e+00> : vector<16x32xf32>
    %9 = tpu.matmul %7, %8, %cst_10 {dimension_numbers = #tpu.dot_dimension_numbers<[1], [0], [0], [1], [0, 0, 1, 1], [], []>} : vector<16x16xbf16>, vector<16x32xbf16>, vector<16x32xf32> -> vector<16x32xf32>
    %c0_11 = arith.constant 0 : index
    %c0_12 = arith.constant 0 : index
    %10 = vector.load %arg5[%c0_11, %c0_12] : memref<1x32xf32, #tpu.memory_space<vmem>>, vector<1x32xf32>
    %11 = vector.broadcast %10 : vector<1x32xf32> to vector<16x32xf32>
    %12 = arith.addf %9, %11 : vector<16x32xf32>
    %cst_13 = arith.constant 0.000000e+00 : f32
    %13 = vector.broadcast %cst_13 : f32 to vector<16x32xf32>
    %14 = arith.maximumf %12, %13 : vector<16x32xf32>
    %15 = arith.truncf %14 : vector<16x32xf32> to vector<16x32xbf16>
    %c0_14 = arith.constant 0 : index
    %c0_15 = arith.constant 0 : index
    %16 = vector.load %arg6[%c0_14, %c0_15] : memref<32x8xbf16, #tpu.memory_space<vmem>>, vector<32x8xbf16>
    %cst_16 = arith.constant dense<0.000000e+00> : vector<16x8xf32>
    %17 = tpu.matmul %15, %16, %cst_16 {dimension_numbers = #tpu.dot_dimension_numbers<[1], [0], [0], [1], [0, 0, 1, 1], [], []>} : vector<16x32xbf16>, vector<32x8xbf16>, vector<16x8xf32> -> vector<16x8xf32>
    %18 = arith.truncf %17 : vector<16x8xf32> to vector<16x8xbf16>
    %cst_17 = arith.constant dense<0.000000e+00> : vector<16x8xf32>
    %19 = tpu.matmul %1, %18, %cst_17 {dimension_numbers = #tpu.dot_dimension_numbers<[1], [0], [0], [1], [0, 0, 1, 1], [], []>} : vector<16x16xbf16>, vector<16x8xbf16>, vector<16x8xf32> -> vector<16x8xf32>
    %c0_18 = arith.constant 0 : index
    %c0_19 = arith.constant 0 : index
    %20 = vector.load %arg7[%c0_18, %c0_19] : memref<1x8xf32, #tpu.memory_space<vmem>>, vector<1x8xf32>
    %21 = vector.broadcast %20 : vector<1x8xf32> to vector<16x8xf32>
    %22 = arith.addf %19, %21 : vector<16x8xf32>
    %c0_20 = arith.constant 0 : index
    %c0_21 = arith.constant 0 : index
    %23 = vector.load %arg8[%c0_20, %c0_21] : memref<32x8xbf16, #tpu.memory_space<vmem>>, vector<32x8xbf16>
    %cst_22 = arith.constant dense<0.000000e+00> : vector<16x8xf32>
    %24 = tpu.matmul %15, %23, %cst_22 {dimension_numbers = #tpu.dot_dimension_numbers<[1], [0], [0], [1], [0, 0, 1, 1], [], []>} : vector<16x32xbf16>, vector<32x8xbf16>, vector<16x8xf32> -> vector<16x8xf32>
    %25 = arith.truncf %24 : vector<16x8xf32> to vector<16x8xbf16>
    %cst_23 = arith.constant dense<0.000000e+00> : vector<16x8xf32>
    %26 = tpu.matmul %1, %25, %cst_23 {dimension_numbers = #tpu.dot_dimension_numbers<[1], [0], [0], [1], [0, 0, 1, 1], [], []>} : vector<16x16xbf16>, vector<16x8xbf16>, vector<16x8xf32> -> vector<16x8xf32>
    %c0_24 = arith.constant 0 : index
    %c0_25 = arith.constant 0 : index
    %27 = vector.load %arg9[%c0_24, %c0_25] : memref<1x8xf32, #tpu.memory_space<vmem>>, vector<1x8xf32>
    %28 = vector.broadcast %27 : vector<1x8xf32> to vector<16x8xf32>
    %29 = arith.addf %26, %28 : vector<16x8xf32>
    %cst_26 = arith.constant 5.000000e-01 : f32
    %30 = vector.broadcast %cst_26 : f32 to vector<16x8xf32>
    %31 = arith.mulf %30, %29 : vector<16x8xf32>
    %32 = math.exp %31 : vector<16x8xf32>
    %33 = arith.mulf %5, %32 : vector<16x8xf32>
    %34 = arith.addf %22, %33 : vector<16x8xf32>
    %35 = arith.truncf %34 : vector<16x8xf32> to vector<16x8xbf16>
    %cst_27 = arith.constant dense<0.000000e+00> : vector<16x8xf32>
    %36 = tpu.matmul %1, %35, %cst_27 {dimension_numbers = #tpu.dot_dimension_numbers<[1], [0], [0], [1], [0, 0, 1, 1], [], []>} : vector<16x16xbf16>, vector<16x8xbf16>, vector<16x8xf32> -> vector<16x8xf32>
    %37 = arith.truncf %36 : vector<16x8xf32> to vector<16x8xbf16>
    %c0_28 = arith.constant 0 : index
    %c0_29 = arith.constant 0 : index
    %38 = vector.load %arg10[%c0_28, %c0_29] : memref<8x32xbf16, #tpu.memory_space<vmem>>, vector<8x32xbf16>
    %cst_30 = arith.constant dense<0.000000e+00> : vector<16x32xf32>
    %39 = tpu.matmul %37, %38, %cst_30 {dimension_numbers = #tpu.dot_dimension_numbers<[1], [0], [0], [1], [0, 0, 1, 1], [], []>} : vector<16x8xbf16>, vector<8x32xbf16>, vector<16x32xf32> -> vector<16x32xf32>
    %c0_31 = arith.constant 0 : index
    %c0_32 = arith.constant 0 : index
    %40 = vector.load %arg11[%c0_31, %c0_32] : memref<1x32xf32, #tpu.memory_space<vmem>>, vector<1x32xf32>
    %41 = vector.broadcast %40 : vector<1x32xf32> to vector<16x32xf32>
    %42 = arith.addf %39, %41 : vector<16x32xf32>
    %cst_33 = arith.constant 0.000000e+00 : f32
    %43 = vector.broadcast %cst_33 : f32 to vector<16x32xf32>
    %44 = arith.maximumf %42, %43 : vector<16x32xf32>
    %45 = arith.truncf %44 : vector<16x32xf32> to vector<16x32xbf16>
    %c0_34 = arith.constant 0 : index
    %c0_35 = arith.constant 0 : index
    %46 = vector.load %arg12[%c0_34, %c0_35] : memref<32x16xbf16, #tpu.memory_space<vmem>>, vector<32x16xbf16>
    %cst_36 = arith.constant dense<0.000000e+00> : vector<16x16xf32>
    %47 = tpu.matmul %45, %46, %cst_36 {dimension_numbers = #tpu.dot_dimension_numbers<[1], [0], [0], [1], [0, 0, 1, 1], [], []>} : vector<16x32xbf16>, vector<32x16xbf16>, vector<16x16xf32> -> vector<16x16xf32>
    %48 = arith.truncf %47 : vector<16x16xf32> to vector<16x16xbf16>
    %cst_37 = arith.constant dense<0.000000e+00> : vector<16x16xf32>
    %49 = tpu.matmul %1, %48, %cst_37 {dimension_numbers = #tpu.dot_dimension_numbers<[1], [0], [0], [1], [0, 0, 1, 1], [], []>} : vector<16x16xbf16>, vector<16x16xbf16>, vector<16x16xf32> -> vector<16x16xf32>
    %c0_38 = arith.constant 0 : index
    %c0_39 = arith.constant 0 : index
    %50 = vector.load %arg13[%c0_38, %c0_39] : memref<1x16xf32, #tpu.memory_space<vmem>>, vector<1x16xf32>
    %51 = vector.broadcast %50 : vector<1x16xf32> to vector<16x16xf32>
    %52 = arith.addf %49, %51 : vector<16x16xf32>
    %c0_40 = arith.constant 0 : index
    %c0_41 = arith.constant 0 : index
    %c0_42 = arith.constant 0 : index
    %53 = vector.load %arg14[%c0_40, %c0_41, %c0_42] : memref<1x16x16xf32, #tpu.memory_space<vmem>>, vector<1x16x16xf32>
    %54 = vector.shape_cast %53 : vector<1x16x16xf32> to vector<16x16xf32>
    %55 = vector.shape_cast %52 : vector<16x16xf32> to vector<1x16x16xf32>
    tpu.vector_store %arg14[%c0_40, %c0_41, %c0_42], %55 {strides = array<i32>} : memref<1x16x16xf32, #tpu.memory_space<vmem>>, vector<1x16x16xf32>,
    %c0_43 = arith.constant 0 : index
    %c0_44 = arith.constant 0 : index
    %c0_45 = arith.constant 0 : index
    %56 = vector.load %arg15[%c0_43, %c0_44, %c0_45] : memref<1x16x8xf32, #tpu.memory_space<vmem>>, vector<1x16x8xf32>
    %57 = vector.shape_cast %56 : vector<1x16x8xf32> to vector<16x8xf32>
    %58 = vector.shape_cast %22 : vector<16x8xf32> to vector<1x16x8xf32>
    tpu.vector_store %arg15[%c0_43, %c0_44, %c0_45], %58 {strides = array<i32>} : memref<1x16x8xf32, #tpu.memory_space<vmem>>, vector<1x16x8xf32>,
    %c0_46 = arith.constant 0 : index
    %c0_47 = arith.constant 0 : index
    %c0_48 = arith.constant 0 : index
    %59 = vector.load %arg16[%c0_46, %c0_47, %c0_48] : memref<1x16x8xf32, #tpu.memory_space<vmem>>, vector<1x16x8xf32>
    %60 = vector.shape_cast %59 : vector<1x16x8xf32> to vector<16x8xf32>
    %61 = vector.shape_cast %29 : vector<16x8xf32> to vector<1x16x8xf32>
    tpu.vector_store %arg16[%c0_46, %c0_47, %c0_48], %61 {strides = array<i32>} : memref<1x16x8xf32, #tpu.memory_space<vmem>>, vector<1x16x8xf32>,
    return
  }
  func.func @transform_0(%arg0: i32) -> (i32, i32, i32) {
    %c0_i32 = arith.constant 0 : i32
    %c0_i32_0 = arith.constant 0 : i32
    %c0_i32_1 = arith.constant 0 : i32
    return %arg0, %c0_i32, %c0_i32_0 : i32, i32, i32
  }
  func.func @transform_1(%arg0: i32) -> (i32, i32, i32) {
    %c0_i32 = arith.constant 0 : i32
    %c0_i32_0 = arith.constant 0 : i32
    %c0_i32_1 = arith.constant 0 : i32
    return %arg0, %c0_i32, %c0_i32_0 : i32, i32, i32
  }
  func.func @transform_2(%arg0: i32) -> (i32, i32, i32) {
    %c0_i32 = arith.constant 0 : i32
    %c0_i32_0 = arith.constant 0 : i32
    %c0_i32_1 = arith.constant 0 : i32
    return %arg0, %c0_i32, %c0_i32_0 : i32, i32, i32
  }
  func.func @transform_3(%arg0: i32) -> (i32, i32) {
    %c0_i32 = arith.constant 0 : i32
    %c0_i32_0 = arith.constant 0 : i32
    %c0_i32_1 = arith.constant 0 : i32
    return %c0_i32, %c0_i32_0 : i32, i32
  }
  func.func @transform_4(%arg0: i32) -> (i32, i32) {
    %c0_i32 = arith.constant 0 : i32
    %c0_i32_0 = arith.constant 0 : i32
    %c0_i32_1 = arith.constant 0 : i32
    return %c0_i32, %c0_i32_0 : i32, i32
  }
  func.func @transform_5(%arg0: i32) -> (i32, i32) {
    %c0_i32 = arith.constant 0 : i32
    %c0_i32_0 = arith.constant 0 : i32
    %c0_i32_1 = arith.constant 0 : i32
    return %c0_i32, %c0_i32_0 : i32, i32
  }
  func.func @transform_6(%arg0: i32) -> (i32, i32) {
    %c0_i32 = arith.constant 0 : i32
    %c0_i32_0 = arith.constant 0 : i32
    %c0_i32_1 = arith.constant 0 : i32
    return %c0_i32, %c0_i32_0 : i32, i32
  }
  func.func @transform_7(%arg0: i32) -> (i32, i32) {
    %c0_i32 = arith.constant 0 : i32
    %c0_i32_0 = arith.constant 0 : i32
    %c0_i32_1 = arith.constant 0 : i32
    return %c0_i32, %c0_i32_0 : i32, i32
  }
  func.func @transform_8(%arg0: i32) -> (i32, i32) {
    %c0_i32 = arith.constant 0 : i32
    %c0_i32_0 = arith.constant 0 : i32
    %c0_i32_1 = arith.constant 0 : i32
    return %c0_i32, %c0_i32_0 : i32, i32
  }
  func.func @transform_9(%arg0: i32) -> (i32, i32) {
    %c0_i32 = arith.constant 0 : i32
    %c0_i32_0 = arith.constant 0 : i32
    %c0_i32_1 = arith.constant 0 : i32
    return %c0_i32, %c0_i32_0 : i32, i32
  }
  func.func @transform_10(%arg0: i32) -> (i32, i32) {
    %c0_i32 = arith.constant 0 : i32
    %c0_i32_0 = arith.constant 0 : i32
    %c0_i32_1 = arith.constant 0 : i32
    return %c0_i32, %c0_i32_0 : i32, i32
  }
  func.func @transform_11(%arg0: i32) -> (i32, i32) {
    %c0_i32 = arith.constant 0 : i32
    %c0_i32_0 = arith.constant 0 : i32
    %c0_i32_1 = arith.constant 0 : i32
    return %c0_i32, %c0_i32_0 : i32, i32
  }
  func.func @transform_12(%arg0: i32) -> (i32, i32) {
    %c0_i32 = arith.constant 0 : i32
    %c0_i32_0 = arith.constant 0 : i32
    %c0_i32_1 = arith.constant 0 : i32
    return %c0_i32, %c0_i32_0 : i32, i32
  }
  func.func @transform_13(%arg0: i32) -> (i32, i32, i32) {
    %c0_i32 = arith.constant 0 : i32
    %c0_i32_0 = arith.constant 0 : i32
    %c0_i32_1 = arith.constant 0 : i32
    return %arg0, %c0_i32, %c0_i32_0 : i32, i32, i32
  }
  func.func @transform_14(%arg0: i32) -> (i32, i32, i32) {
    %c0_i32 = arith.constant 0 : i32
    %c0_i32_0 = arith.constant 0 : i32
    %c0_i32_1 = arith.constant 0 : i32
    return %arg0, %c0_i32, %c0_i32_0 : i32, i32, i32
  }
  func.func @transform_15(%arg0: i32) -> (i32, i32, i32) {
    %c0_i32 = arith.constant 0 : i32
    %c0_i32_0 = arith.constant 0 : i32
    %c0_i32_1 = arith.constant 0 : i32
    return %arg0, %c0_i32, %c0_i32_0 : i32, i32, i32
  }
}

</mosaic_0001>

<llo_original>
// kernel: gvae_forward.1
$region0: #{gvae_forward.1}
  #allocation0 [shape = 'u32[]', space=smem, size = 0x4, offset = 0x4, fixed_abs, tag = 'smem constant byte address 0x4 - core index']
  #allocation1 [shape = 'u32[144,128]{1,0:T(1,128)}', space=vmem, size = 0x12000, scoped, tag = 'internal scratch']
  %s0 = inlined_call_operand.vmem [shape: bf16[4,16,16], index: 0, kind: input, shape index: {}]
  %s1 = inlined_call_operand.vmem [shape: bf16[4,16,16], index: 1, kind: input, shape index: {}]
  %s2 = inlined_call_operand.vmem [shape: f32[4,16,8], index: 2, kind: input, shape index: {}]
  %s3 = inlined_call_operand.vmem [shape: bf16[16,32], index: 3, kind: input, shape index: {}]
  %s4 = inlined_call_operand.vmem [shape: f32[1,32], index: 4, kind: input, shape index: {}]
  %s5 = inlined_call_operand.vmem [shape: bf16[32,8], index: 5, kind: input, shape index: {}]
  %s6 = inlined_call_operand.vmem [shape: f32[1,8], index: 6, kind: input, shape index: {}]
  %s7 = inlined_call_operand.vmem [shape: bf16[32,8], index: 7, kind: input, shape index: {}]
  %s8 = inlined_call_operand.vmem [shape: f32[1,8], index: 8, kind: input, shape index: {}]
  %s9 = inlined_call_operand.vmem [shape: bf16[8,32], index: 9, kind: input, shape index: {}]
  %s10 = inlined_call_operand.vmem [shape: f32[1,32], index: 10, kind: input, shape index: {}]
  %s11 = inlined_call_operand.vmem [shape: bf16[32,16], index: 11, kind: input, shape index: {}]
  %s12 = inlined_call_operand.vmem [shape: f32[1,16], index: 12, kind: input, shape index: {}]
  %s13 = inlined_call_operand.hbm [shape: f32[4,16,16], index: 13, kind: output, shape index: {0}]
  %s14 = inlined_call_operand.vmem [shape: f32[4,16,8], index: 14, kind: output, shape index: {1}]
  %s15 = inlined_call_operand.vmem [shape: f32[4,16,8], index: 15, kind: output, shape index: {2}]
  %16 = xla_tuple %s13, %s14, %s15
  %s17 = sld [smem:[#allocation0]]
  $region101: #{gvae_forward.1} parent=0
    _
  %s19 = ssub.s32 1, %s17
  %s20 = scalar_select 0, %s19, %s17
  $region1: #{gvae_forward.1} parent=0
    #allocation2 [shape = 'u8[16384]{0}', space=vmem, size = 0x4000, scoped, tag = 'output window, operand 0']
    #allocation3 [shape = 's32[2]{0}', space=sflag, size = 0x8, scoped, tag = 'scoped memory for gvae_forward.1']
    %21 = vsyncpa [#allocation3], 0
    %s22 = scalar_lea.sflag [#allocation3], 1
    %23 = vsyncpa %s22, 0
    loop: start=0, step=1, limit=6
    $region2: #{gvae_forward.1} parent=1 // loop_pre_header
      _
    $region3: #{gvae_forward.1} parent=1 // loop_header
      %s25 = sphi 0, %s29
      %p26 = scmp.ge.s32.totalorder %s25, 6
      %s35 = sphi 0, %s37
      %s38 = sphi 0, %s35
      %s39 = sphi 0, %s38
      %s55 = sphi 0, %s39
      %s61 = sphi 0, %s63
      %s64 = sphi 0, %s61
      %s65 = sphi 0, %s64
      %s81 = sphi 0, %s65
      %s87 = sphi 0, %s89
      %s90 = sphi 0, %s87
      %s91 = sphi 0, %s90
      %s107 = sphi 0, %s91
      %s111 = sphi 0, %s111
      %s113 = sphi 0, %s111
      %s114 = sphi 0, %s113
      %s128 = sphi 0, %s114
      %s132 = sphi 0, %s132
      %s134 = sphi 0, %s132
      %s135 = sphi 0, %s134
      %s149 = sphi 0, %s135
      %s153 = sphi 0, %s153
      %s155 = sphi 0, %s153
      %s156 = sphi 0, %s155
      %s170 = sphi 0, %s156
      %s174 = sphi 0, %s174
      %s176 = sphi 0, %s174
      %s177 = sphi 0, %s176
      %s191 = sphi 0, %s177
      %s195 = sphi 0, %s195
      %s197 = sphi 0, %s195
      %s198 = sphi 0, %s197
      %s212 = sphi 0, %s198
      %s216 = sphi 0, %s216
      %s218 = sphi 0, %s216
      %s219 = sphi 0, %s218
      %s233 = sphi 0, %s219
      %s237 = sphi 0, %s237
      %s239 = sphi 0, %s237
      %s240 = sphi 0, %s239
      %s254 = sphi 0, %s240
      %s258 = sphi 0, %s258
      %s260 = sphi 0, %s258
      %s261 = sphi 0, %s260
      %s275 = sphi 0, %s261
      %s279 = sphi 0, %s279
      %s281 = sphi 0, %s279
      %s282 = sphi 0, %s281
      %s296 = sphi 0, %s282
      %s300 = sphi 0, %s300
      %s302 = sphi 0, %s300
      %s303 = sphi 0, %s302
      %s317 = sphi 0, %s303
      %s323 = sphi 0, %s325
      %s326 = sphi 0, %s323
      %s327 = sphi 0, %s326
      %s343 = sphi 0, %s327
      %s349 = sphi 0, %s351
      %s352 = sphi 0, %s349
      %s353 = sphi 0, %s352
      %s369 = sphi 0, %s353
      %s375 = sphi 0, %s377
      %s378 = sphi 0, %s375
      %s379 = sphi 0, %s378
      %s395 = sphi 0, %s379
    $region4: #{gvae_forward.1} parent=1 // loop_header_branch
      %28 = sbr.rel (%p26) target = $region8
    $region5: #{gvae_forward.1} parent=1 // loop_body
      %s30 = ssub.s32 %s25, 1
      %s31 = ssub.s32 %s25, 2
      %s32 = sadd.s32 %s25, 1
      %s33 = ssub.s32 %s25, %s32
      %p34 = scmp.eq.s32.totalorder %s33, 0
      %s36 = sadd.s32 %s35, 1
      %s37 = scalar_select %p34, %s35, %s36
      %p40 = pneg %p34
      %p41 = scmp.eq.s32.totalorder %s25, 3
      %p42 = por %p40, %p41
      %p43 = scmp.ne.s32.totalorder %s35, %s38
      %p44 = scmp.eq.s32.totalorder %s25, 0
      %p45 = por %p43, %p44
      %p46 = scmp.ne.s32.totalorder %s35, %s38
      %p47 = scmp.eq.s32.totalorder %s30, 3
      %p48 = por %p46, %p47
      %p49 = scmp.ne.s32.totalorder %s38, %s39
      %p50 = scmp.eq.s32.totalorder %s30, 0
      %p51 = por %p49, %p50
      %p52 = scmp.ne.s32.totalorder %s38, %s39
      %p53 = scmp.eq.s32.totalorder %s31, 3
      %p54 = por %p52, %p53
      %p56 = scmp.ne.s32.totalorder %s39, %s55
      %p57 = scmp.eq.s32.totalorder %s31, 0
      %p58 = por %p56, %p57
      %s59 = ssub.s32 %s25, %s32
      %p60 = scmp.eq.s32.totalorder %s59, 0
      %s62 = sadd.s32 %s61, 1
      %s63 = scalar_select %p60, %s61, %s62
      %p66 = pneg %p60
      %p67 = scmp.eq.s32.totalorder %s25, 3
      %p68 = por %p66, %p67
      %p69 = scmp.ne.s32.totalorder %s61, %s64
      %p70 = scmp.eq.s32.totalorder %s25, 0
      %p71 = por %p69, %p70
      %p72 = scmp.ne.s32.totalorder %s61, %s64
      %p73 = scmp.eq.s32.totalorder %s30, 3
      %p74 = por %p72, %p73
      %p75 = scmp.ne.s32.totalorder %s64, %s65
      %p76 = scmp.eq.s32.totalorder %s30, 0
      %p77 = por %p75, %p76
      %p78 = scmp.ne.s32.totalorder %s64, %s65
      %p79 = scmp.eq.s32.totalorder %s31, 3
      %p80 = por %p78, %p79
      %p82 = scmp.ne.s32.totalorder %s65, %s81
      %p83 = scmp.eq.s32.totalorder %s31, 0
      %p84 = por %p82, %p83
      %s85 = ssub.s32 %s25, %s32
      %p86 = scmp.eq.s32.totalorder %s85, 0
      %s88 = sadd.s32 %s87, 1
      %s89 = scalar_select %p86, %s87, %s88
      %p92 = pneg %p86
      %p93 = scmp.eq.s32.totalorder %s25, 3
      %p94 = por %p92, %p93
      %p95 = scmp.ne.s32.totalorder %s87, %s90
      %p96 = scmp.eq.s32.totalorder %s25, 0
      %p97 = por %p95, %p96
      %p98 = scmp.ne.s32.totalorder %s87, %s90
      %p99 = scmp.eq.s32.totalorder %s30, 3
      %p100 = por %p98, %p99
      %p101 = scmp.ne.s32.totalorder %s90, %s91
      %p102 = scmp.eq.s32.totalorder %s30, 0
      %p103 = por %p101, %p102
      %p104 = scmp.ne.s32.totalorder %s90, %s91
      %p105 = scmp.eq.s32.totalorder %s31, 3
      %p106 = por %p104, %p105
      %p108 = scmp.ne.s32.totalorder %s91, %s107
      %p109 = scmp.eq.s32.totalorder %s31, 0
      %p110 = por %p108, %p109
      %s112 = sadd.s32 %s111, 1
      %p115 = scmp.eq.s32.totalorder %s25, 3
      %p116 = scmp.ne.s32.totalorder %s111, %s113
      %p117 = scmp.eq.s32.totalorder %s25, 0
      %p118 = por %p116, %p117
      %p119 = scmp.ne.s32.totalorder %s111, %s113
      %p120 = scmp.eq.s32.totalorder %s30, 3
      %p121 = por %p119, %p120
      %p122 = scmp.ne.s32.totalorder %s113, %s114
      %p123 = scmp.eq.s32.totalorder %s30, 0
      %p124 = por %p122, %p123
      %p125 = scmp.ne.s32.totalorder %s113, %s114
      %p126 = scmp.eq.s32.totalorder %s31, 3
      %p127 = por %p125, %p126
      %p129 = scmp.ne.s32.totalorder %s114, %s128
      %p130 = scmp.eq.s32.totalorder %s31, 0
      %p131 = por %p129, %p130
      %s133 = sadd.s32 %s132, 1
      %p136 = scmp.eq.s32.totalorder %s25, 3
      %p137 = scmp.ne.s32.totalorder %s132, %s134
      %p138 = scmp.eq.s32.totalorder %s25, 0
      %p139 = por %p137, %p138
      %p140 = scmp.ne.s32.totalorder %s132, %s134
      %p141 = scmp.eq.s32.totalorder %s30, 3
      %p142 = por %p140, %p141
      %p143 = scmp.ne.s32.totalorder %s134, %s135
      %p144 = scmp.eq.s32.totalorder %s30, 0
      %p145 = por %p143, %p144
      %p146 = scmp.ne.s32.totalorder %s134, %s135
      %p147 = scmp.eq.s32.totalorder %s31, 3
      %p148 = por %p146, %p147
      %p150 = scmp.ne.s32.totalorder %s135, %s149
      %p151 = scmp.eq.s32.totalorder %s31, 0
      %p152 = por %p150, %p151
      %s154 = sadd.s32 %s153, 1
      %p157 = scmp.eq.s32.totalorder %s25, 3
      %p158 = scmp.ne.s32.totalorder %s153, %s155
      %p159 = scmp.eq.s32.totalorder %s25, 0
      %p160 = por %p158, %p159
      %p161 = scmp.ne.s32.totalorder %s153, %s155
      %p162 = scmp.eq.s32.totalorder %s30, 3
      %p163 = por %p161, %p162
      %p164 = scmp.ne.s32.totalorder %s155, %s156
      %p165 = scmp.eq.s32.totalorder %s30, 0
      %p166 = por %p164, %p165
      %p167 = scmp.ne.s32.totalorder %s155, %s156
      %p168 = scmp.eq.s32.totalorder %s31, 3
      %p169 = por %p167, %p168
      %p171 = scmp.ne.s32.totalorder %s156, %s170
      %p172 = scmp.eq.s32.totalorder %s31, 0
      %p173 = por %p171, %p172
      %s175 = sadd.s32 %s174, 1
      %p178 = scmp.eq.s32.totalorder %s25, 3
      %p179 = scmp.ne.s32.totalorder %s174, %s176
      %p180 = scmp.eq.s32.totalorder %s25, 0
      %p181 = por %p179, %p180
      %p182 = scmp.ne.s32.totalorder %s174, %s176
      %p183 = scmp.eq.s32.totalorder %s30, 3
      %p184 = por %p182, %p183
      %p185 = scmp.ne.s32.totalorder %s176, %s177
      %p186 = scmp.eq.s32.totalorder %s30, 0
      %p187 = por %p185, %p186
      %p188 = scmp.ne.s32.totalorder %s176, %s177
      %p189 = scmp.eq.s32.totalorder %s31, 3
      %p190 = por %p188, %p189
      %p192 = scmp.ne.s32.totalorder %s177, %s191
      %p193 = scmp.eq.s32.totalorder %s31, 0
      %p194 = por %p192, %p193
      %s196 = sadd.s32 %s195, 1
      %p199 = scmp.eq.s32.totalorder %s25, 3
      %p200 = scmp.ne.s32.totalorder %s195, %s197
      %p201 = scmp.eq.s32.totalorder %s25, 0
      %p202 = por %p200, %p201
      %p203 = scmp.ne.s32.totalorder %s195, %s197
      %p204 = scmp.eq.s32.totalorder %s30, 3
      %p205 = por %p203, %p204
      %p206 = scmp.ne.s32.totalorder %s197, %s198
      %p207 = scmp.eq.s32.totalorder %s30, 0
      %p208 = por %p206, %p207
      %p209 = scmp.ne.s32.totalorder %s197, %s198
      %p210 = scmp.eq.s32.totalorder %s31, 3
      %p211 = por %p209, %p210
      %p213 = scmp.ne.s32.totalorder %s198, %s212
      %p214 = scmp.eq.s32.totalorder %s31, 0
      %p215 = por %p213, %p214
      %s217 = sadd.s32 %s216, 1
      %p220 = scmp.eq.s32.totalorder %s25, 3
      %p221 = scmp.ne.s32.totalorder %s216, %s218
      %p222 = scmp.eq.s32.totalorder %s25, 0
      %p223 = por %p221, %p222
      %p224 = scmp.ne.s32.totalorder %s216, %s218
      %p225 = scmp.eq.s32.totalorder %s30, 3
      %p226 = por %p224, %p225
      %p227 = scmp.ne.s32.totalorder %s218, %s219
      %p228 = scmp.eq.s32.totalorder %s30, 0
      %p229 = por %p227, %p228
      %p230 = scmp.ne.s32.totalorder %s218, %s219
      %p231 = scmp.eq.s32.totalorder %s31, 3
      %p232 = por %p230, %p231
      %p234 = scmp.ne.s32.totalorder %s219, %s233
      %p235 = scmp.eq.s32.totalorder %s31, 0
      %p236 = por %p234, %p235
      %s238 = sadd.s32 %s237, 1
      %p241 = scmp.eq.s32.totalorder %s25, 3
      %p242 = scmp.ne.s32.totalorder %s237, %s239
      %p243 = scmp.eq.s32.totalorder %s25, 0
      %p244 = por %p242, %p243
      %p245 = scmp.ne.s32.totalorder %s237, %s239
      %p246 = scmp.eq.s32.totalorder %s30, 3
      %p247 = por %p245, %p246
      %p248 = scmp.ne.s32.totalorder %s239, %s240
      %p249 = scmp.eq.s32.totalorder %s30, 0
      %p250 = por %p248, %p249
      %p251 = scmp.ne.s32.totalorder %s239, %s240
      %p252 = scmp.eq.s32.totalorder %s31, 3
      %p253 = por %p251, %p252
      %p255 = scmp.ne.s32.totalorder %s240, %s254
      %p256 = scmp.eq.s32.totalorder %s31, 0
      %p257 = por %p255, %p256
      %s259 = sadd.s32 %s258, 1
      %p262 = scmp.eq.s32.totalorder %s25, 3
      %p263 = scmp.ne.s32.totalorder %s258, %s260
      %p264 = scmp.eq.s32.totalorder %s25, 0
      %p265 = por %p263, %p264
      %p266 = scmp.ne.s32.totalorder %s258, %s260
      %p267 = scmp.eq.s32.totalorder %s30, 3
      %p268 = por %p266, %p267
      %p269 = scmp.ne.s32.totalorder %s260, %s261
      %p270 = scmp.eq.s32.totalorder %s30, 0
      %p271 = por %p269, %p270
      %p272 = scmp.ne.s32.totalorder %s260, %s261
      %p273 = scmp.eq.s32.totalorder %s31, 3
      %p274 = por %p272, %p273
      %p276 = scmp.ne.s32.totalorder %s261, %s275
      %p277 = scmp.eq.s32.totalorder %s31, 0
      %p278 = por %p276, %p277
      %s280 = sadd.s32 %s279, 1
      %p283 = scmp.eq.s32.totalorder %s25, 3
      %p284 = scmp.ne.s32.totalorder %s279, %s281
      %p285 = scmp.eq.s32.totalorder %s25, 0
      %p286 = por %p284, %p285
      %p287 = scmp.ne.s32.totalorder %s279, %s281
      %p288 = scmp.eq.s32.totalorder %s30, 3
      %p289 = por %p287, %p288
      %p290 = scmp.ne.s32.totalorder %s281, %s282
      %p291 = scmp.eq.s32.totalorder %s30, 0
      %p292 = por %p290, %p291
      %p293 = scmp.ne.s32.totalorder %s281, %s282
      %p294 = scmp.eq.s32.totalorder %s31, 3
      %p295 = por %p293, %p294
      %p297 = scmp.ne.s32.totalorder %s282, %s296
      %p298 = scmp.eq.s32.totalorder %s31, 0
      %p299 = por %p297, %p298
      %s301 = sadd.s32 %s300, 1
      %p304 = scmp.eq.s32.totalorder %s25, 3
      %p305 = scmp.ne.s32.totalorder %s300, %s302
      %p306 = scmp.eq.s32.totalorder %s25, 0
      %p307 = por %p305, %p306
      %p308 = scmp.ne.s32.totalorder %s300, %s302
      %p309 = scmp.eq.s32.totalorder %s30, 3
      %p310 = por %p308, %p309
      %p311 = scmp.ne.s32.totalorder %s302, %s303
      %p312 = scmp.eq.s32.totalorder %s30, 0
      %p313 = por %p311, %p312
      %p314 = scmp.ne.s32.totalorder %s302, %s303
      %p315 = scmp.eq.s32.totalorder %s31, 3
      %p316 = por %p314, %p315
      %p318 = scmp.ne.s32.totalorder %s303, %s317
      %p319 = scmp.eq.s32.totalorder %s31, 0
      %p320 = por %p318, %p319
      %s321 = ssub.s32 %s25, %s32
      %p322 = scmp.eq.s32.totalorder %s321, 0
      %s324 = sadd.s32 %s323, 1
      %s325 = scalar_select %p322, %s323, %s324
      %p328 = pneg %p322
      %p329 = scmp.eq.s32.totalorder %s25, 3
      %p330 = por %p328, %p329
      %p331 = scmp.ne.s32.totalorder %s323, %s326
      %p332 = scmp.eq.s32.totalorder %s25, 0
      %p333 = por %p331, %p332
      %p334 = scmp.ne.s32.totalorder %s323, %s326
      %p335 = scmp.eq.s32.totalorder %s30, 3
      %p336 = por %p334, %p335
      %p337 = scmp.ne.s32.totalorder %s326, %s327
      %p338 = scmp.eq.s32.totalorder %s30, 0
      %p339 = por %p337, %p338
      %p340 = scmp.ne.s32.totalorder %s326, %s327
      %p341 = scmp.eq.s32.totalorder %s31, 3
      %p342 = por %p340, %p341
      %p344 = scmp.ne.s32.totalorder %s327, %s343
      %p345 = scmp.eq.s32.totalorder %s31, 0
      %p346 = por %p344, %p345
      %s347 = ssub.s32 %s25, %s32
      %p348 = scmp.eq.s32.totalorder %s347, 0
      %s350 = sadd.s32 %s349, 1
      %s351 = scalar_select %p348, %s349, %s350
      %p354 = pneg %p348
      %p355 = scmp.eq.s32.totalorder %s25, 3
      %p356 = por %p354, %p355
      %p357 = scmp.ne.s32.totalorder %s349, %s352
      %p358 = scmp.eq.s32.totalorder %s25, 0
      %p359 = por %p357, %p358
      %p360 = scmp.ne.s32.totalorder %s349, %s352
      %p361 = scmp.eq.s32.totalorder %s30, 3
      %p362 = por %p360, %p361
      %p363 = scmp.ne.s32.totalorder %s352, %s353
      %p364 = scmp.eq.s32.totalorder %s30, 0
      %p365 = por %p363, %p364
      %p366 = scmp.ne.s32.totalorder %s352, %s353
      %p367 = scmp.eq.s32.totalorder %s31, 3
      %p368 = por %p366, %p367
      %p370 = scmp.ne.s32.totalorder %s353, %s369
      %p371 = scmp.eq.s32.totalorder %s31, 0
      %p372 = por %p370, %p371
      %s373 = ssub.s32 %s25, %s32
      %p374 = scmp.eq.s32.totalorder %s373, 0
      %s376 = sadd.s32 %s375, 1
      %s377 = scalar_select %p374, %s375, %s376
      %p380 = pneg %p374
      %p381 = scmp.eq.s32.totalorder %s25, 3
      %p382 = por %p380, %p381
      %p383 = scmp.ne.s32.totalorder %s375, %s378
      %p384 = scmp.eq.s32.totalorder %s25, 0
      %p385 = por %p383, %p384
      %p386 = scmp.ne.s32.totalorder %s375, %s378
      %p387 = scmp.eq.s32.totalorder %s30, 3
      %p388 = por %p386, %p387
      %p389 = scmp.ne.s32.totalorder %s378, %s379
      %p390 = scmp.eq.s32.totalorder %s30, 0
      %p391 = por %p389, %p390
      %p392 = scmp.ne.s32.totalorder %s378, %s379
      %p393 = scmp.eq.s32.totalorder %s31, 3
      %p394 = por %p392, %p393
      %p396 = scmp.ne.s32.totalorder %s379, %s395
      %p397 = scmp.eq.s32.totalorder %s31, 0
      %p398 = por %p396, %p397
      %p399 = scmp.le.s32.totalorder 1, %s25
      %p400 = scmp.lt.s32.totalorder %s25, 5
      %p401 = pnand %p399, %p400
      %p402 = pneg %p401
      // Predicated region
      $region9: #{gvae_forward.1} parent=5 // pred_check
        _
      $region10: #{gvae_forward.1} parent=5 // pred_check_branch
        %404 = sbr.rel (%p401) target = $region12
      $region11: #{gvae_forward.1} parent=5 // pred_region
        %s405 = ssub.s32 %s25, 1
        // Predicated region
        $region13: #{gvae_forward.1} parent=11 // pred_check
          %p406 = pneg %p124
        $region14: #{gvae_forward.1} parent=11 // pred_check_branch
          %408 = sbr.rel (%p406) target = $region16
        $region15: #{gvae_forward.1} parent=11 // pred_region
          _
        $region16: #{gvae_forward.1} parent=11 // pred_fallthru
          _
        // Predicated region
        $region17: #{gvae_forward.1} parent=11 // pred_check
          %p409 = pneg %p145
        $region18: #{gvae_forward.1} parent=11 // pred_check_branch
          %411 = sbr.rel (%p409) target = $region20
        $region19: #{gvae_forward.1} parent=11 // pred_region
          _
        $region20: #{gvae_forward.1} parent=11 // pred_fallthru
          _
        // Predicated region
        $region21: #{gvae_forward.1} parent=11 // pred_check
          %p412 = pneg %p166
        $region22: #{gvae_forward.1} parent=11 // pred_check_branch
          %414 = sbr.rel (%p412) target = $region24
        $region23: #{gvae_forward.1} parent=11 // pred_region
          _
        $region24: #{gvae_forward.1} parent=11 // pred_fallthru
          _
        // Predicated region
        $region25: #{gvae_forward.1} parent=11 // pred_check
          %p415 = pneg %p187
        $region26: #{gvae_forward.1} parent=11 // pred_check_branch
          %417 = sbr.rel (%p415) target = $region28
        $region27: #{gvae_forward.1} parent=11 // pred_region
          _
        $region28: #{gvae_forward.1} parent=11 // pred_fallthru
          _
        // Predicated region
        $region29: #{gvae_forward.1} parent=11 // pred_check
          %p418 = pneg %p208
        $region30: #{gvae_forward.1} parent=11 // pred_check_branch
          %420 = sbr.rel (%p418) target = $region32
        $region31: #{gvae_forward.1} parent=11 // pred_region
          _
        $region32: #{gvae_forward.1} parent=11 // pred_fallthru
          _
        // Predicated region
        $region33: #{gvae_forward.1} parent=11 // pred_check
          %p421 = pneg %p229
        $region34: #{gvae_forward.1} parent=11 // pred_check_branch
          %423 = sbr.rel (%p421) target = $region36
        $region35: #{gvae_forward.1} parent=11 // pred_region
          _
        $region36: #{gvae_forward.1} parent=11 // pred_fallthru
          _
        // Predicated region
        $region37: #{gvae_forward.1} parent=11 // pred_check
          %p424 = pneg %p250
        $region38: #{gvae_forward.1} parent=11 // pred_check_branch
          %426 = sbr.rel (%p424) target = $region40
        $region39: #{gvae_forward.1} parent=11 // pred_region
          _
        $region40: #{gvae_forward.1} parent=11 // pred_fallthru
          _
        // Predicated region
        $region41: #{gvae_forward.1} parent=11 // pred_check
          %p427 = pneg %p271
        $region42: #{gvae_forward.1} parent=11 // pred_check_branch
          %429 = sbr.rel (%p427) target = $region44
        $region43: #{gvae_forward.1} parent=11 // pred_region
          _
        $region44: #{gvae_forward.1} parent=11 // pred_fallthru
          _
        // Predicated region
        $region45: #{gvae_forward.1} parent=11 // pred_check
          %p430 = pneg %p292
        $region46: #{gvae_forward.1} parent=11 // pred_check_branch
          %432 = sbr.rel (%p430) target = $region48
        $region47: #{gvae_forward.1} parent=11 // pred_region
          _
        $region48: #{gvae_forward.1} parent=11 // pred_fallthru
          _
        // Predicated region
        $region49: #{gvae_forward.1} parent=11 // pred_check
          %p433 = pneg %p313
        $region50: #{gvae_forward.1} parent=11 // pred_check_branch
          %435 = sbr.rel (%p433) target = $region52
        $region51: #{gvae_forward.1} parent=11 // pred_region
          _
        $region52: #{gvae_forward.1} parent=11 // pred_fallthru
          _
      $region12: #{gvae_forward.1} parent=5 // pred_fallthru
        _
      %p436 = scmp.lt.s32.totalorder %s25, 4
      // Predicated region
      $region53: #{gvae_forward.1} parent=5 // pred_check
        %p437 = pneg %p436
      $region54: #{gvae_forward.1} parent=5 // pred_check_branch
        %439 = sbr.rel (%p437) target = $region56
      $region55: #{gvae_forward.1} parent=5 // pred_region
        // Predicated region
        $region57: #{gvae_forward.1} parent=55 // pred_check
          %p440 = pneg %p45
        $region58: #{gvae_forward.1} parent=55 // pred_check_branch
          %442 = sbr.rel (%p440) target = $region60
        $region59: #{gvae_forward.1} parent=55 // pred_region
          %p443 = scmp.lt.s32.totalorder %s25, 3
          %s444 = scalar_select %p443, %s25, 3
          %s445 = smul.addr %s444, 2
          %s446 = smul.addr %s445, 4
          %s447 = scalar_lea.vmem %s0, %s446
        $region60: #{gvae_forward.1} parent=55 // pred_fallthru
          _
        // Predicated region
        $region61: #{gvae_forward.1} parent=55 // pred_check
          %p448 = pneg %p71
        $region62: #{gvae_forward.1} parent=55 // pred_check_branch
          %450 = sbr.rel (%p448) target = $region64
        $region63: #{gvae_forward.1} parent=55 // pred_region
          %p451 = scmp.lt.s32.totalorder %s25, 3
          %s452 = scalar_select %p451, %s25, 3
          %s453 = smul.addr %s452, 2
          %s454 = smul.addr %s453, 4
          %s455 = scalar_lea.vmem %s1, %s454
        $region64: #{gvae_forward.1} parent=55 // pred_fallthru
          _
        // Predicated region
        $region65: #{gvae_forward.1} parent=55 // pred_check
          %p456 = pneg %p97
        $region66: #{gvae_forward.1} parent=55 // pred_check_branch
          %458 = sbr.rel (%p456) target = $region68
        $region67: #{gvae_forward.1} parent=55 // pred_region
          %p459 = scmp.lt.s32.totalorder %s25, 3
          %s460 = scalar_select %p459, %s25, 3
          %s461 = smul.addr %s460, 2
          %s462 = smul.addr %s461, 8
          %s463 = scalar_lea.vmem %s2, %s462
        $region68: #{gvae_forward.1} parent=55 // pred_fallthru
          _
      $region56: #{gvae_forward.1} parent=5 // pred_fallthru
        _
      %p464 = scmp.le.s32.totalorder 1, %s25
      %p465 = scmp.lt.s32.totalorder %s25, 5
      %p466 = pnand %p464, %p465
      %p467 = pneg %p466
      // Predicated region
      $region69: #{gvae_forward.1} parent=5 // pred_check
        _
      $region70: #{gvae_forward.1} parent=5 // pred_check_branch
        %469 = sbr.rel (%p466) target = $region72
      $region71: #{gvae_forward.1} parent=5 // pred_region
        %s470 = ssub.s32 %s25, 1
        %p471 = scmp.lt.s32.totalorder %s30, 3
        %s472 = scalar_select %p471, %s30, 3
        %s473 = smul.addr %s472, 2
        %s474 = smul.addr %s473, 4
        %s475 = scalar_lea.vmem %s0, %s474
        %p476 = pneg %p51
        %p477 = pneg %p48
        %p478 = scmp.lt.s32.totalorder %s30, 3
        %s479 = scalar_select %p478, %s30, 3
        %s480 = smul.addr %s479, 2
        %s481 = smul.addr %s480, 4
        %s482 = scalar_lea.vmem %s1, %s481
        %p483 = pneg %p77
        %p484 = pneg %p74
        %p485 = scmp.lt.s32.totalorder %s30, 3
        %s486 = scalar_select %p485, %s30, 3
        %s487 = smul.addr %s486, 2
        %s488 = smul.addr %s487, 8
        %s489 = scalar_lea.vmem %s2, %s488
        %p490 = pneg %p103
        %p491 = pneg %p100
        %p492 = pneg %p124
        %p493 = pneg %p121
        %p494 = pneg %p145
        %p495 = pneg %p142
        %p496 = pneg %p166
        %p497 = pneg %p163
        %p498 = pneg %p187
        %p499 = pneg %p184
        %p500 = pneg %p208
        %p501 = pneg %p205
        %p502 = pneg %p229
        %p503 = pneg %p226
        %p504 = pneg %p250
        %p505 = pneg %p247
        %p506 = pneg %p271
        %p507 = pneg %p268
        %p508 = pneg %p292
        %p509 = pneg %p289
        %p510 = pneg %p313
        %p511 = pneg %p310
        %p512 = pneg %p339
        %p513 = pneg %p336
        %s514 = sand.u32 %s326, 1
        %s515 = scalar_lea.sflag [#allocation3], %s514
        %s516 = sand.u32 %s326, 1
        %s517 = smul.addr %s516, 16
        %s518 = scalar_lea.vmem [#allocation2], %s517
        %p519 = pneg %p365
        %p520 = pneg %p362
        %p521 = scmp.lt.s32.totalorder %s30, 3
        %s522 = scalar_select %p521, %s30, 3
        %s523 = smul.addr %s522, 2
        %s524 = smul.addr %s523, 8
        %s525 = scalar_lea.vmem %s14, %s524
        %p526 = pneg %p391
        %p527 = pneg %p388
        %p528 = scmp.lt.s32.totalorder %s30, 3
        %s529 = scalar_select %p528, %s30, 3
        %s530 = smul.addr %s529, 2
        %s531 = smul.addr %s530, 8
        %s532 = scalar_lea.vmem %s15, %s531
        %p533 = scmp.lt.s32.totalorder %s30, 3
        %s534 = scalar_select %p533, %s30, 3
        %s535 = smul.addr %s534, 2
        %s536 = smul.addr %s535, 4
        %s537 = scalar_lea.vmem %s0, %s536
        %p538 = scmp.lt.s32.totalorder %s30, 3
        %s539 = scalar_select %p538, %s30, 3
        %s540 = smul.addr %s539, 2
        %s541 = smul.addr %s540, 4
        %s542 = scalar_lea.vmem %s1, %s541
        %p543 = scmp.lt.s32.totalorder %s30, 3
        %s544 = scalar_select %p543, %s30, 3
        %s545 = smul.addr %s544, 2
        %s546 = smul.addr %s545, 8
        %s547 = scalar_lea.vmem %s2, %s546
        %p548 = scmp.lt.s32.totalorder %s30, 3
        %s549 = scalar_select %p548, %s30, 3
        %s550 = smul.addr %s549, 2
        %s551 = smul.addr %s550, 8
        %s552 = scalar_lea.vmem %s14, %s551
        %p553 = scmp.lt.s32.totalorder %s30, 3
        %s554 = scalar_select %p553, %s30, 3
        %s555 = smul.addr %s554, 2
        %s556 = smul.addr %s555, 8
        %s557 = scalar_lea.vmem %s15, %s556
        %v559 = vld [vmem:[%s537] sm:$0xf]
        %v560 = vld [vmem:[%s537 + $0x4] sm:$0xf]
        %v561 = vld [vmem:[%s542] sm:$0xf]
        %v562 = vld [vmem:[%s542 + $0x4] sm:$0xf]
        %v563 = vld [vmem:[%s547] sm:$0xff]
        %v564 = vld [vmem:[%s547 + $0x8] sm:$0xff]
        %v567 = vunpack.c.l.b16 %v559
        %v568 = vunpack.c.l.b16 %v560
        %v569 = vpack.c.b16 %v568, %v567
        %v572 = vunpack.c.l.b16 %v561
        %v573 = vunpack.c.l.b16 %v562
        %v574 = vpack.c.b16 %v573, %v572
        %vm576 = vcmask 130048
        %v578 = vsel %vm576, %v569, 0
        %580 = vmatprep.subr.bf16.mxu0 0
        %581 = vmatpush1.bf16.msra.mxu0 0
        %582 = vmatprep.subr.bf16.mxu0 0
        %583 = vmatpush1.bf16.msra.mxu0 0
        %584 = vmatprep.subr.bf16.mxu0 0
        %585 = vmatpush1.bf16.msra.mxu0 0
        %586 = vmatprep.subr.bf16.mxu0 0
        %587 = vmatpush1.bf16.msra.mxu0 0
        %588 = vmatprep.subr.bf16.mxu0 0
        %589 = vmatpush1.bf16.msra.mxu0 0
        %590 = vmatprep.subr.bf16.mxu0 0
        %591 = vmatpush1.bf16.msra.mxu0 0
        %592 = vmatprep.subr.bf16.mxu0 0
        %593 = vmatpush1.bf16.msra.mxu0 0
        %594 = vmatprep.subr.bf16.mxu0 0
        %595 = vmatpush1.bf16.msra.mxu0 %v574
        %596 = vmatprep.subr.bf16.mxu0 0
        %597 = vmatpush2.bf16.msra.mxu0 0
        %598 = vmatprep.subr.bf16.mxu0 0
        %599 = vmatpush2.bf16.msra.mxu0 0
        %600 = vmatprep.subr.bf16.mxu0 0
        %601 = vmatpush2.bf16.msra.mxu0 0
        %602 = vmatprep.subr.bf16.mxu0 0
        %603 = vmatpush2.bf16.msra.mxu0 0
        %604 = vmatprep.subr.bf16.mxu0 0
        %605 = vmatpush2.bf16.msra.mxu0 0
        %606 = vmatprep.subr.bf16.mxu0 0
        %607 = vmatpush2.bf16.msra.mxu0 0
        %608 = vmatprep.subr.bf16.mxu0 0
        %609 = vmatpush2.bf16.msra.mxu0 0
        %610 = vmatprep.subr.bf16.mxu0 0
        %611 = vmatpush2.bf16.msra.mxu0 0
        %612 = vmatprep.mubr.bf16.mxu0 0
        %613 = vmatmul.mubr.bf16.gmra.mxu0 %v578
        %v614 = vpop.f32.mrf.mxu0
        %v615 = vadd.f32 0.0, %v614
        %v616 = vpop.f32.mrf.mxu0
        %v617 = vpop.f32.mrf.mxu0
        %v618 = vadd.f32 0.0, %v617
        %v619 = vpop.f32.mrf.mxu0
        %620 = vdwg.mxu0
        %v621 = vpack.c.bf16 %v618, %v615
        %v622 = vld [vmem:[%s3] sm:$0xf]
        %v623 = vld [vmem:[%s3 + $0x4] sm:$0xf]
        %v624 = vld [vmem:[%s4] sm:$0x1]
        %v626 = vlaneseq
        %v627 = vshrl.u32 %v626, 7
        %v628 = vsub.s32 0, %v627
        %v629 = vrot.slane %v624, %v628
        %v633 = vunpack.c.l.b16 %v622
        %v634 = vunpack.c.l.b16 %v623
        %v635 = vpack.c.b16 %v634, %v633
        %v638 = vsel %vm576, %v621, 0
        %640 = vmatprep.subr.bf16.mxu0 0
        %641 = vmatpush1.bf16.msra.mxu0 0
        %642 = vmatprep.subr.bf16.mxu0 0
        %643 = vmatpush1.bf16.msra.mxu0 0
        %644 = vmatprep.subr.bf16.mxu0 0
        %645 = vmatpush1.bf16.msra.mxu0 0
        %646 = vmatprep.subr.bf16.mxu0 0
        %647 = vmatpush1.bf16.msra.mxu0 0
        %648 = vmatprep.subr.bf16.mxu0 0
        %649 = vmatpush1.bf16.msra.mxu0 0
        %650 = vmatprep.subr.bf16.mxu0 0
        %651 = vmatpush1.bf16.msra.mxu0 0
        %652 = vmatprep.subr.bf16.mxu0 0
        %653 = vmatpush1.bf16.msra.mxu0 0
        %654 = vmatprep.subr.bf16.mxu0 0
        %655 = vmatpush1.bf16.msra.mxu0 %v635
        %656 = vmatprep.subr.bf16.mxu0 0
        %657 = vmatpush2.bf16.msra.mxu0 0
        %658 = vmatprep.subr.bf16.mxu0 0
        %659 = vmatpush2.bf16.msra.mxu0 0
        %660 = vmatprep.subr.bf16.mxu0 0
        %661 = vmatpush2.bf16.msra.mxu0 0
        %662 = vmatprep.subr.bf16.mxu0 0
        %663 = vmatpush2.bf16.msra.mxu0 0
        %664 = vmatprep.subr.bf16.mxu0 0
        %665 = vmatpush2.bf16.msra.mxu0 0
        %666 = vmatprep.subr.bf16.mxu0 0
        %667 = vmatpush2.bf16.msra.mxu0 0
        %668 = vmatprep.subr.bf16.mxu0 0
        %669 = vmatpush2.bf16.msra.mxu0 0
        %670 = vmatprep.subr.bf16.mxu0 0
        %671 = vmatpush2.bf16.msra.mxu0 0
        %672 = vmatprep.mubr.bf16.mxu0 0
        %673 = vmatmul.mubr.bf16.gmra.mxu0 %v638
        %v674 = vpop.f32.mrf.mxu0
        %v675 = vadd.f32 %v629, %v674
        %v676 = vpop.f32.mrf.mxu0
        %v677 = vpop.f32.mrf.mxu0
        %v678 = vadd.f32 %v629, %v677
        %v679 = vpop.f32.mrf.mxu0
        %680 = vdwg.mxu0
        %v681 = vmax.f32 %v675, 0.0
        %v682 = vmax.f32 %v678, 0.0
        %v683 = vpack.c.bf16 %v682, %v681
        %v684 = vld [vmem:[%s5] sm:$0xf]
        %v685 = vld [vmem:[%s5 + $0x4] sm:$0xf]
        %v686 = vld [vmem:[%s5 + $0x8] sm:$0xf]
        %v687 = vld [vmem:[%s5 + $0xc] sm:$0xf]
        %v692 = vunpack.c.l.b16 %v684
        %v693 = vunpack.c.l.b16 %v685
        %v694 = vunpack.c.l.b16 %v686
        %v695 = vunpack.c.l.b16 %v687
        %v696 = vpack.c.b16 %v693, %v692
        %v697 = vpack.c.b16 %v695, %v694
        %vm700 = vcmask 261120
        %v702 = vsel %vm700, %v683, 0
        %704 = vmatprep.subr.bf16.mxu0 0
        %705 = vmatpush1.bf16.msra.mxu0 0
        %706 = vmatprep.subr.bf16.mxu0 0
        %707 = vmatpush1.bf16.msra.mxu0 0
        %708 = vmatprep.subr.bf16.mxu0 0
        %709 = vmatpush1.bf16.msra.mxu0 0
        %710 = vmatprep.subr.bf16.mxu0 0
        %711 = vmatpush1.bf16.msra.mxu0 0
        %712 = vmatprep.subr.bf16.mxu0 0
        %713 = vmatpush1.bf16.msra.mxu0 0
        %714 = vmatprep.subr.bf16.mxu0 0
        %715 = vmatpush1.bf16.msra.mxu0 0
        %716 = vmatprep.subr.bf16.mxu0 0
        %717 = vmatpush1.bf16.msra.mxu0 %v697
        %718 = vmatprep.subr.bf16.mxu0 0
        %719 = vmatpush1.bf16.msra.mxu0 %v696
        %720 = vmatprep.subr.bf16.mxu0 0
        %721 = vmatpush2.bf16.msra.mxu0 0
        %722 = vmatprep.subr.bf16.mxu0 0
        %723 = vmatpush2.bf16.msra.mxu0 0
        %724 = vmatprep.subr.bf16.mxu0 0
        %725 = vmatpush2.bf16.msra.mxu0 0
        %726 = vmatprep.subr.bf16.mxu0 0
        %727 = vmatpush2.bf16.msra.mxu0 0
        %728 = vmatprep.subr.bf16.mxu0 0
        %729 = vmatpush2.bf16.msra.mxu0 0
        %730 = vmatprep.subr.bf16.mxu0 0
        %731 = vmatpush2.bf16.msra.mxu0 0
        %732 = vmatprep.subr.bf16.mxu0 0
        %733 = vmatpush2.bf16.msra.mxu0 0
        %734 = vmatprep.subr.bf16.mxu0 0
        %735 = vmatpush2.bf16.msra.mxu0 0
        %736 = vmatprep.mubr.bf16.mxu0 0
        %737 = vmatmul.mubr.bf16.gmra.mxu0 %v702
        %v738 = vpop.f32.mrf.mxu0
        %v739 = vadd.f32 0.0, %v738
        %v740 = vpop.f32.mrf.mxu0
        %v741 = vpop.f32.mrf.mxu0
        %v742 = vadd.f32 0.0, %v741
        %v743 = vpop.f32.mrf.mxu0
        %744 = vdwg.mxu0
        %v745 = vpack.c.bf16 %v742, %v739
        %v746 = vld [vmem:[%s6] sm:$0x1]
        %v748 = vlaneseq
        %v749 = vshrl.u32 %v748, 7
        %v750 = vsub.s32 0, %v749
        %v751 = vrot.slane %v746, %v750
        %753 = vmatprep.subr.bf16.mxu0 0
        %754 = vmatpush1.bf16.msra.mxu0 0
        %755 = vmatprep.subr.bf16.mxu0 0
        %756 = vmatpush1.bf16.msra.mxu0 0
        %757 = vmatprep.subr.bf16.mxu0 0
        %758 = vmatpush1.bf16.msra.mxu0 0
        %759 = vmatprep.subr.bf16.mxu0 0
        %760 = vmatpush1.bf16.msra.mxu0 0
        %761 = vmatprep.subr.bf16.mxu0 0
        %762 = vmatpush1.bf16.msra.mxu0 0
        %763 = vmatprep.subr.bf16.mxu0 0
        %764 = vmatpush1.bf16.msra.mxu0 0
        %765 = vmatprep.subr.bf16.mxu0 0
        %766 = vmatpush1.bf16.msra.mxu0 0
        %767 = vmatprep.subr.bf16.mxu0 0
        %768 = vmatpush1.bf16.msra.mxu0 %v745
        %769 = vmatprep.subr.bf16.mxu0 0
        %770 = vmatpush2.bf16.msra.mxu0 0
        %771 = vmatprep.subr.bf16.mxu0 0
        %772 = vmatpush2.bf16.msra.mxu0 0
        %773 = vmatprep.subr.bf16.mxu0 0
        %774 = vmatpush2.bf16.msra.mxu0 0
        %775 = vmatprep.subr.bf16.mxu0 0
        %776 = vmatpush2.bf16.msra.mxu0 0
        %777 = vmatprep.subr.bf16.mxu0 0
        %778 = vmatpush2.bf16.msra.mxu0 0
        %779 = vmatprep.subr.bf16.mxu0 0
        %780 = vmatpush2.bf16.msra.mxu0 0
        %781 = vmatprep.subr.bf16.mxu0 0
        %782 = vmatpush2.bf16.msra.mxu0 0
        %783 = vmatprep.subr.bf16.mxu0 0
        %784 = vmatpush2.bf16.msra.mxu0 0
        %785 = vmatprep.mubr.bf16.mxu0 0
        %786 = vmatmul.mubr.bf16.gmra.mxu0 %v578
        %v787 = vpop.f32.mrf.mxu0
        %v788 = vadd.f32 %v751, %v787
        %v789 = vpop.f32.mrf.mxu0
        %v790 = vpop.f32.mrf.mxu0
        %v791 = vadd.f32 %v751, %v790
        %v792 = vpop.f32.mrf.mxu0
        %793 = vdwg.mxu0
        %v794 = vld [vmem:[%s7] sm:$0xf]
        %v795 = vld [vmem:[%s7 + $0x4] sm:$0xf]
        %v796 = vld [vmem:[%s7 + $0x8] sm:$0xf]
        %v797 = vld [vmem:[%s7 + $0xc] sm:$0xf]
        %v802 = vunpack.c.l.b16 %v794
        %v803 = vunpack.c.l.b16 %v795
        %v804 = vunpack.c.l.b16 %v796
        %v805 = vunpack.c.l.b16 %v797
        %v806 = vpack.c.b16 %v803, %v802
        %v807 = vpack.c.b16 %v805, %v804
        %810 = vmatprep.subr.bf16.mxu0 0
        %811 = vmatpush1.bf16.msra.mxu0 0
        %812 = vmatprep.subr.bf16.mxu0 0
        %813 = vmatpush1.bf16.msra.mxu0 0
        %814 = vmatprep.subr.bf16.mxu0 0
        %815 = vmatpush1.bf16.msra.mxu0 0
        %816 = vmatprep.subr.bf16.mxu0 0
        %817 = vmatpush1.bf16.msra.mxu0 0
        %818 = vmatprep.subr.bf16.mxu0 0
        %819 = vmatpush1.bf16.msra.mxu0 0
        %820 = vmatprep.subr.bf16.mxu0 0
        %821 = vmatpush1.bf16.msra.mxu0 0
        %822 = vmatprep.subr.bf16.mxu0 0
        %823 = vmatpush1.bf16.msra.mxu0 %v807
        %824 = vmatprep.subr.bf16.mxu0 0
        %825 = vmatpush1.bf16.msra.mxu0 %v806
        %826 = vmatprep.subr.bf16.mxu0 0
        %827 = vmatpush2.bf16.msra.mxu0 0
        %828 = vmatprep.subr.bf16.mxu0 0
        %829 = vmatpush2.bf16.msra.mxu0 0
        %830 = vmatprep.subr.bf16.mxu0 0
        %831 = vmatpush2.bf16.msra.mxu0 0
        %832 = vmatprep.subr.bf16.mxu0 0
        %833 = vmatpush2.bf16.msra.mxu0 0
        %834 = vmatprep.subr.bf16.mxu0 0
        %835 = vmatpush2.bf16.msra.mxu0 0
        %836 = vmatprep.subr.bf16.mxu0 0
        %837 = vmatpush2.bf16.msra.mxu0 0
        %838 = vmatprep.subr.bf16.mxu0 0
        %839 = vmatpush2.bf16.msra.mxu0 0
        %840 = vmatprep.subr.bf16.mxu0 0
        %841 = vmatpush2.bf16.msra.mxu0 0
        %842 = vmatprep.mubr.bf16.mxu0 0
        %843 = vmatmul.mubr.bf16.gmra.mxu0 %v702
        %v844 = vpop.f32.mrf.mxu0
        %v845 = vadd.f32 0.0, %v844
        %v846 = vpop.f32.mrf.mxu0
        %v847 = vpop.f32.mrf.mxu0
        %v848 = vadd.f32 0.0, %v847
        %v849 = vpop.f32.mrf.mxu0
        %850 = vdwg.mxu0
        %v851 = vpack.c.bf16 %v848, %v845
        %v852 = vld [vmem:[%s8] sm:$0x1]
        %v854 = vlaneseq
        %v855 = vshrl.u32 %v854, 7
        %v856 = vsub.s32 0, %v855
        %v857 = vrot.slane %v852, %v856
        %859 = vmatprep.subr.bf16.mxu0 0
        %860 = vmatpush1.bf16.msra.mxu0 0
        %861 = vmatprep.subr.bf16.mxu0 0
        %862 = vmatpush1.bf16.msra.mxu0 0
        %863 = vmatprep.subr.bf16.mxu0 0
        %864 = vmatpush1.bf16.msra.mxu0 0
        %865 = vmatprep.subr.bf16.mxu0 0
        %866 = vmatpush1.bf16.msra.mxu0 0
        %867 = vmatprep.subr.bf16.mxu0 0
        %868 = vmatpush1.bf16.msra.mxu0 0
        %869 = vmatprep.subr.bf16.mxu0 0
        %870 = vmatpush1.bf16.msra.mxu0 0
        %871 = vmatprep.subr.bf16.mxu0 0
        %872 = vmatpush1.bf16.msra.mxu0 0
        %873 = vmatprep.subr.bf16.mxu0 0
        %874 = vmatpush1.bf16.msra.mxu0 %v851
        %875 = vmatprep.subr.bf16.mxu0 0
        %876 = vmatpush2.bf16.msra.mxu0 0
        %877 = vmatprep.subr.bf16.mxu0 0
        %878 = vmatpush2.bf16.msra.mxu0 0
        %879 = vmatprep.subr.bf16.mxu0 0
        %880 = vmatpush2.bf16.msra.mxu0 0
        %881 = vmatprep.subr.bf16.mxu0 0
        %882 = vmatpush2.bf16.msra.mxu0 0
        %883 = vmatprep.subr.bf16.mxu0 0
        %884 = vmatpush2.bf16.msra.mxu0 0
        %885 = vmatprep.subr.bf16.mxu0 0
        %886 = vmatpush2.bf16.msra.mxu0 0
        %887 = vmatprep.subr.bf16.mxu0 0
        %888 = vmatpush2.bf16.msra.mxu0 0
        %889 = vmatprep.subr.bf16.mxu0 0
        %890 = vmatpush2.bf16.msra.mxu0 0
        %891 = vmatprep.mubr.bf16.mxu0 0
        %892 = vmatmul.mubr.bf16.gmra.mxu0 %v578
        %v893 = vpop.f32.mrf.mxu0
        %v894 = vadd.f32 %v857, %v893
        %v895 = vpop.f32.mrf.mxu0
        %v896 = vpop.f32.mrf.mxu0
        %v897 = vadd.f32 %v857, %v896
        %v898 = vpop.f32.mrf.mxu0
        %899 = vdwg.mxu0
        %v900 = vmul.f32 %v894, 0.5
        %v901 = vmul.f32 %v897, 0.5
        %v902 = vmul.f32 %v900, 1.442695
        %v903 = vpow.pop %v902
        %v904 = vmul.f32 %v901, 1.442695
        %v905 = vpow.pop %v904
        %v906 = vmul.f32 %v563, %v903
        %v907 = vmul.f32 %v564, %v905
        %v908 = vadd.f32 %v788, %v906
        %v909 = vadd.f32 %v791, %v907
        %v910 = vpack.c.bf16 %v909, %v908
        %911 = vmatprep.subr.bf16.mxu0 0
        %912 = vmatpush1.bf16.msra.mxu0 0
        %913 = vmatprep.subr.bf16.mxu0 0
        %914 = vmatpush1.bf16.msra.mxu0 0
        %915 = vmatprep.subr.bf16.mxu0 0
        %916 = vmatpush1.bf16.msra.mxu0 0
        %917 = vmatprep.subr.bf16.mxu0 0
        %918 = vmatpush1.bf16.msra.mxu0 0
        %919 = vmatprep.subr.bf16.mxu0 0
        %920 = vmatpush1.bf16.msra.mxu0 0
        %921 = vmatprep.subr.bf16.mxu0 0
        %922 = vmatpush1.bf16.msra.mxu0 0
        %923 = vmatprep.subr.bf16.mxu0 0
        %924 = vmatpush1.bf16.msra.mxu0 0
        %925 = vmatprep.subr.bf16.mxu0 0
        %926 = vmatpush1.bf16.msra.mxu0 %v910
        %927 = vmatprep.subr.bf16.mxu0 0
        %928 = vmatpush2.bf16.msra.mxu0 0
        %929 = vmatprep.subr.bf16.mxu0 0
        %930 = vmatpush2.bf16.msra.mxu0 0
        %931 = vmatprep.subr.bf16.mxu0 0
        %932 = vmatpush2.bf16.msra.mxu0 0
        %933 = vmatprep.subr.bf16.mxu0 0
        %934 = vmatpush2.bf16.msra.mxu0 0
        %935 = vmatprep.subr.bf16.mxu0 0
        %936 = vmatpush2.bf16.msra.mxu0 0
        %937 = vmatprep.subr.bf16.mxu0 0
        %938 = vmatpush2.bf16.msra.mxu0 0
        %939 = vmatprep.subr.bf16.mxu0 0
        %940 = vmatpush2.bf16.msra.mxu0 0
        %941 = vmatprep.subr.bf16.mxu0 0
        %942 = vmatpush2.bf16.msra.mxu0 0
        %943 = vmatprep.mubr.bf16.mxu0 0
        %944 = vmatmul.mubr.bf16.gmra.mxu0 %v578
        %v945 = vpop.f32.mrf.mxu0
        %v946 = vadd.f32 0.0, %v945
        %v947 = vpop.f32.mrf.mxu0
        %v948 = vpop.f32.mrf.mxu0
        %v949 = vadd.f32 0.0, %v948
        %v950 = vpop.f32.mrf.mxu0
        %951 = vdwg.mxu0
        %v952 = vpack.c.bf16 %v949, %v946
        %v953 = vld [vmem:[%s9] sm:$0xf]
        %v954 = vld [vmem:[%s10] sm:$0x1]
        %v956 = vlaneseq
        %v957 = vshrl.u32 %v956, 7
        %v958 = vsub.s32 0, %v957
        %v959 = vrot.slane %v954, %v958
        %vm961 = vcmask 64512
        %v963 = vsel %vm961, %v952, 0
        %vm965 = vcmask 1043456
        %v967 = vsel %vm965, %v953, 0
        %969 = vmatprep.subr.bf16.mxu0 0
        %970 = vmatpush1.bf16.msra.mxu0 0
        %971 = vmatprep.subr.bf16.mxu0 0
        %972 = vmatpush1.bf16.msra.mxu0 0
        %973 = vmatprep.subr.bf16.mxu0 0
        %974 = vmatpush1.bf16.msra.mxu0 0
        %975 = vmatprep.subr.bf16.mxu0 0
        %976 = vmatpush1.bf16.msra.mxu0 0
        %977 = vmatprep.subr.bf16.mxu0 0
        %978 = vmatpush1.bf16.msra.mxu0 0
        %979 = vmatprep.subr.bf16.mxu0 0
        %980 = vmatpush1.bf16.msra.mxu0 0
        %981 = vmatprep.subr.bf16.mxu0 0
        %982 = vmatpush1.bf16.msra.mxu0 0
        %983 = vmatprep.subr.bf16.mxu0 0
        %984 = vmatpush1.bf16.msra.mxu0 %v967
        %985 = vmatprep.subr.bf16.mxu0 0
        %986 = vmatpush2.bf16.msra.mxu0 0
        %987 = vmatprep.subr.bf16.mxu0 0
        %988 = vmatpush2.bf16.msra.mxu0 0
        %989 = vmatprep.subr.bf16.mxu0 0
        %990 = vmatpush2.bf16.msra.mxu0 0
        %991 = vmatprep.subr.bf16.mxu0 0
        %992 = vmatpush2.bf16.msra.mxu0 0
        %993 = vmatprep.subr.bf16.mxu0 0
        %994 = vmatpush2.bf16.msra.mxu0 0
        %995 = vmatprep.subr.bf16.mxu0 0
        %996 = vmatpush2.bf16.msra.mxu0 0
        %997 = vmatprep.subr.bf16.mxu0 0
        %998 = vmatpush2.bf16.msra.mxu0 0
        %999 = vmatprep.subr.bf16.mxu0 0
        %1000 = vmatpush2.bf16.msra.mxu0 0
        %1001 = vmatprep.mubr.bf16.mxu0 0
        %1002 = vmatmul.mubr.bf16.gmra.mxu0 %v963
        %v1003 = vpop.f32.mrf.mxu0
        %v1004 = vadd.f32 %v959, %v1003
        %v1005 = vpop.f32.mrf.mxu0
        %v1006 = vpop.f32.mrf.mxu0
        %v1007 = vadd.f32 %v959, %v1006
        %v1008 = vpop.f32.mrf.mxu0
        %1009 = vdwg.mxu0
        %v1010 = vmax.f32 %v1004, 0.0
        %v1011 = vmax.f32 %v1007, 0.0
        %v1012 = vpack.c.bf16 %v1011, %v1010
        %v1013 = vld [vmem:[%s11] sm:$0xf]
        %v1014 = vld [vmem:[%s11 + $0x4] sm:$0xf]
        %v1015 = vld [vmem:[%s11 + $0x8] sm:$0xf]
        %v1016 = vld [vmem:[%s11 + $0xc] sm:$0xf]
        %v1021 = vunpack.c.l.b16 %v1013
        %v1022 = vunpack.c.l.b16 %v1014
        %v1023 = vunpack.c.l.b16 %v1015
        %v1024 = vunpack.c.l.b16 %v1016
        %v1025 = vpack.c.b16 %v1022, %v1021
        %v1026 = vpack.c.b16 %v1024, %v1023
        %v1030 = vsel %vm700, %v1012, 0
        %1032 = vmatprep.subr.bf16.mxu0 0
        %1033 = vmatpush1.bf16.msra.mxu0 0
        %1034 = vmatprep.subr.bf16.mxu0 0
        %1035 = vmatpush1.bf16.msra.mxu0 0
        %1036 = vmatprep.subr.bf16.mxu0 0
        %1037 = vmatpush1.bf16.msra.mxu0 0
        %1038 = vmatprep.subr.bf16.mxu0 0
        %1039 = vmatpush1.bf16.msra.mxu0 0
        %1040 = vmatprep.subr.bf16.mxu0 0
        %1041 = vmatpush1.bf16.msra.mxu0 0
        %1042 = vmatprep.subr.bf16.mxu0 0
        %1043 = vmatpush1.bf16.msra.mxu0 0
        %1044 = vmatprep.subr.bf16.mxu0 0
        %1045 = vmatpush1.bf16.msra.mxu0 %v1026
        %1046 = vmatprep.subr.bf16.mxu0 0
        %1047 = vmatpush1.bf16.msra.mxu0 %v1025
        %1048 = vmatprep.subr.bf16.mxu0 0
        %1049 = vmatpush2.bf16.msra.mxu0 0
        %1050 = vmatprep.subr.bf16.mxu0 0
        %1051 = vmatpush2.bf16.msra.mxu0 0
        %1052 = vmatprep.subr.bf16.mxu0 0
        %1053 = vmatpush2.bf16.msra.mxu0 0
        %1054 = vmatprep.subr.bf16.mxu0 0
        %1055 = vmatpush2.bf16.msra.mxu0 0
        %1056 = vmatprep.subr.bf16.mxu0 0
        %1057 = vmatpush2.bf16.msra.mxu0 0
        %1058 = vmatprep.subr.bf16.mxu0 0
        %1059 = vmatpush2.bf16.msra.mxu0 0
        %1060 = vmatprep.subr.bf16.mxu0 0
        %1061 = vmatpush2.bf16.msra.mxu0 0
        %1062 = vmatprep.subr.bf16.mxu0 0
        %1063 = vmatpush2.bf16.msra.mxu0 0
        %1064 = vmatprep.mubr.bf16.mxu0 0
        %1065 = vmatmul.mubr.bf16.gmra.mxu0 %v1030
        %v1066 = vpop.f32.mrf.mxu0
        %v1067 = vadd.f32 0.0, %v1066
        %v1068 = vpop.f32.mrf.mxu0
        %v1069 = vpop.f32.mrf.mxu0
        %v1070 = vadd.f32 0.0, %v1069
        %v1071 = vpop.f32.mrf.mxu0
        %1072 = vdwg.mxu0
        %v1073 = vpack.c.bf16 %v1070, %v1067
        %v1074 = vld [vmem:[%s12] sm:$0x1]
        %v1076 = vlaneseq
        %v1077 = vshrl.u32 %v1076, 7
        %v1078 = vsub.s32 0, %v1077
        %v1079 = vrot.slane %v1074, %v1078
        %1081 = vmatprep.subr.bf16.mxu0 0
        %1082 = vmatpush1.bf16.msra.mxu0 0
        %1083 = vmatprep.subr.bf16.mxu0 0
        %1084 = vmatpush1.bf16.msra.mxu0 0
        %1085 = vmatprep.subr.bf16.mxu0 0
        %1086 = vmatpush1.bf16.msra.mxu0 0
        %1087 = vmatprep.subr.bf16.mxu0 0
        %1088 = vmatpush1.bf16.msra.mxu0 0
        %1089 = vmatprep.subr.bf16.mxu0 0
        %1090 = vmatpush1.bf16.msra.mxu0 0
        %1091 = vmatprep.subr.bf16.mxu0 0
        %1092 = vmatpush1.bf16.msra.mxu0 0
        %1093 = vmatprep.subr.bf16.mxu0 0
        %1094 = vmatpush1.bf16.msra.mxu0 0
        %1095 = vmatprep.subr.bf16.mxu0 0
        %1096 = vmatpush1.bf16.msra.mxu0 %v1073
        %1097 = vmatprep.subr.bf16.mxu0 0
        %1098 = vmatpush2.bf16.msra.mxu0 0
        %1099 = vmatprep.subr.bf16.mxu0 0
        %1100 = vmatpush2.bf16.msra.mxu0 0
        %1101 = vmatprep.subr.bf16.mxu0 0
        %1102 = vmatpush2.bf16.msra.mxu0 0
        %1103 = vmatprep.subr.bf16.mxu0 0
        %1104 = vmatpush2.bf16.msra.mxu0 0
        %1105 = vmatprep.subr.bf16.mxu0 0
        %1106 = vmatpush2.bf16.msra.mxu0 0
        %1107 = vmatprep.subr.bf16.mxu0 0
        %1108 = vmatpush2.bf16.msra.mxu0 0
        %1109 = vmatprep.subr.bf16.mxu0 0
        %1110 = vmatpush2.bf16.msra.mxu0 0
        %1111 = vmatprep.subr.bf16.mxu0 0
        %1112 = vmatpush2.bf16.msra.mxu0 0
        %1113 = vmatprep.mubr.bf16.mxu0 0
        %1114 = vmatmul.mubr.bf16.gmra.mxu0 %v578
        %v1115 = vpop.f32.mrf.mxu0
        %v1116 = vadd.f32 %v1079, %v1115
        %v1117 = vpop.f32.mrf.mxu0
        %v1118 = vpop.f32.mrf.mxu0
        %v1119 = vadd.f32 %v1079, %v1118
        %v1120 = vpop.f32.mrf.mxu0
        %1121 = vdwg.mxu0
        %1122 = vst.msk [vmem:[%s518] sm:$0xff] %vm576, %v1116
        %1123 = vst.msk [vmem:[%s518 + $0x8] sm:$0xff] %vm576, %v1119
        %1124 = vst.msk [vmem:[%s552] sm:$0xff] %vm961, %v788
        %1125 = vst.msk [vmem:[%s552 + $0x8] sm:$0xff] %vm961, %v791
        %1126 = vst.msk [vmem:[%s557] sm:$0xff] %vm961, %v894
        %1127 = vst.msk [vmem:[%s557 + $0x8] sm:$0xff] %vm961, %v897
        %s1128 = sand.u32 %s326, 1
        %s1129 = scalar_lea.sflag [#allocation3], %s1128
        %s1130 = sand.u32 %s326, 1
        %s1131 = smul.addr %s1130, 16
        %s1132 = scalar_lea.vmem [#allocation2], %s1131
        %p1133 = scmp.lt.s32.totalorder %s30, 3
        %s1134 = scalar_select %p1133, %s30, 3
        %s1135 = smul.addr %s1134, 2
        %s1136 = smul.addr %s1135, 8
        %s1137 = scalar_lea.vmem %s14, %s1136
        %p1138 = scmp.lt.s32.totalorder %s30, 3
        %s1139 = scalar_select %p1138, %s30, 3
        %s1140 = smul.addr %s1139, 2
        %s1141 = smul.addr %s1140, 8
        %s1142 = scalar_lea.vmem %s15, %s1141
        // Predicated region
        $region73: #{gvae_forward.1} parent=71 // pred_check
          %p1143 = pneg %p336
        $region74: #{gvae_forward.1} parent=71 // pred_check_branch
          %1145 = sbr.rel (%p1143) target = $region76
        $region75: #{gvae_forward.1} parent=71 // pred_region
          %s1147 = ssub.s32 256, 256
          %1148 = vsyncadd %s1129, %s1147
          %s1149 = smul.addr %s30, 2
          %s1150 = smul.addr %s1149, 128
          %s1151 = scalar_lea.hbm %s13, %s1150
          %s1152 = sshll.u32 %s1132, 4
          %s1153 = int_to_ptr.vmem [resolvable:$true] %s1152
          %1158 = dma.vmem_to_hbm [thread:$0]  %s1153, 256, %s1151, %s1129, 128, 128, 8
        $region76: #{gvae_forward.1} parent=71 // pred_fallthru
          _
        // Predicated region
        $region77: #{gvae_forward.1} parent=71 // pred_check
          %p1159 = pneg %p362
        $region78: #{gvae_forward.1} parent=71 // pred_check_branch
          %1161 = sbr.rel (%p1159) target = $region80
        $region79: #{gvae_forward.1} parent=71 // pred_region
          _
        $region80: #{gvae_forward.1} parent=71 // pred_fallthru
          _
        // Predicated region
        $region81: #{gvae_forward.1} parent=71 // pred_check
          %p1162 = pneg %p388
        $region82: #{gvae_forward.1} parent=71 // pred_check_branch
          %1164 = sbr.rel (%p1162) target = $region84
        $region83: #{gvae_forward.1} parent=71 // pred_region
          _
        $region84: #{gvae_forward.1} parent=71 // pred_fallthru
          _
      $region72: #{gvae_forward.1} parent=5 // pred_fallthru
        _
      %p1165 = scmp.le.s32.totalorder 2, %s25
      // Predicated region
      $region85: #{gvae_forward.1} parent=5 // pred_check
        %p1166 = pneg %p1165
      $region86: #{gvae_forward.1} parent=5 // pred_check_branch
        %1168 = sbr.rel (%p1166) target = $region88
      $region87: #{gvae_forward.1} parent=5 // pred_region
        %s1169 = ssub.s32 %s25, 2
        // Predicated region
        $region89: #{gvae_forward.1} parent=87 // pred_check
          %p1170 = pneg %p342
        $region90: #{gvae_forward.1} parent=87 // pred_check_branch
          %1172 = sbr.rel (%p1170) target = $region92
        $region91: #{gvae_forward.1} parent=87 // pred_region
          %s1173 = sand.u32 %s327, 1
          %s1174 = scalar_lea.sflag [#allocation3], %s1173
          %s1175 = sand.u32 %s327, 1
          %s1176 = smul.addr %s1175, 16
          %s1177 = scalar_lea.vmem [#allocation2], %s1176
          %1178 = dma.done %s1174, 256
        $region92: #{gvae_forward.1} parent=87 // pred_fallthru
          _
        // Predicated region
        $region93: #{gvae_forward.1} parent=87 // pred_check
          %p1179 = pneg %p368
        $region94: #{gvae_forward.1} parent=87 // pred_check_branch
          %1181 = sbr.rel (%p1179) target = $region96
        $region95: #{gvae_forward.1} parent=87 // pred_region
          %p1182 = scmp.lt.s32.totalorder %s31, 3
          %s1183 = scalar_select %p1182, %s31, 3
          %s1184 = smul.addr %s1183, 2
          %s1185 = smul.addr %s1184, 8
          %s1186 = scalar_lea.vmem %s14, %s1185
        $region96: #{gvae_forward.1} parent=87 // pred_fallthru
          _
        // Predicated region
        $region97: #{gvae_forward.1} parent=87 // pred_check
          %p1187 = pneg %p394
        $region98: #{gvae_forward.1} parent=87 // pred_check_branch
          %1189 = sbr.rel (%p1187) target = $region100
        $region99: #{gvae_forward.1} parent=87 // pred_region
          %p1190 = scmp.lt.s32.totalorder %s31, 3
          %s1191 = scalar_select %p1190, %s31, 3
          %s1192 = smul.addr %s1191, 2
          %s1193 = smul.addr %s1192, 8
          %s1194 = scalar_lea.vmem %s15, %s1193
        $region100: #{gvae_forward.1} parent=87 // pred_fallthru
          _
      $region88: #{gvae_forward.1} parent=5 // pred_fallthru
        _
    $region6: #{gvae_forward.1} parent=1 // loop_footer
      %s29 = sadd.s32 1, %s25
    $region7: #{gvae_forward.1} parent=1 // loop_footer_branch
      %24 = sbr.rel target = $region3
    $region8: #{gvae_forward.1} parent=1 // loop_exit
      _
    %1195 = vsyncpa [#allocation3], 1
    %s1196 = scalar_lea.sflag [#allocation3], 1
    %1197 = vsyncpa %s1196, 1

</llo_original>
